<compile_context>
chip_gen: v7x
topology: tpu7x:2x2x1
jax: 0.10.0
libtpu: 0.0.40
codegen_flags: <defaults>
</compile_context>

<pallas_src>
import functools
import math

import numpy as np
import jax
import jax.numpy as jnp
from jax.experimental import pallas as pl
from jax.experimental.pallas import tpu as pltpu

H_STEP = 0.1
EPS = 1e-4
OUT_PAD = 128          # lane-dense output slab width (col 0 carries the result)


def sdenet_kernel(x_ref, w0_ref, wmid_ref, pack_ref, noise_ref, o_ref):
    """One batch tile of the SDEnet forward pass.

    x_ref     : [TILE_B, D_IN]    f32   input features
    w0_ref    : [D_IN, H]         f32   first Linear weight (pre-transposed)
    wmid_ref  : [2, H, H]         bf16  middle Linear weights (pre-transposed)
    pack_ref  : [8, H]            f32   rows: b0,b1,b2,b3(col0),wb0,wb1,w3,pad
    noise_ref : [2, TILE_B, H]    f32   uniform noise for the two SDE layers
    o_ref     : [TILE_B, OUT_PAD] f32   lane-dense output slab
    """
    sqrt_h = math.sqrt(H_STEP)
    tile_b, d_in = x_ref.shape
    h = w0_ref.shape[1]

    x = x_ref[...]                    # [TILE_B, D_IN]
    w0 = w0_ref[...]                  # [D_IN, H]
    pack = pack_ref[...]              # [8, H]  (one vreg worth of params)

    # ---- layer 0: K = D_IN (=4) is a degenerate MXU contraction; do it as
    #      D_IN broadcast multiply-adds on the VPU instead. ----
    acc = jnp.broadcast_to(pack[0:1, :], (tile_b, h))          # bias b0
    for k in range(d_in):                                      # static unroll
        acc = acc + x[:, k:k + 1] * w0[k:k + 1, :]
    out = jnp.tanh(acc)

    # ---- two SDE / residual layers (static unroll; bf16 MXU, fp32 elementwise) ----
    for li in range(2):
        b = pack[1 + li:2 + li, :]        # [1, H]
        wb = pack[4 + li:5 + li, :]       # [1, H] Brownian weight row
        n = noise_ref[li]                 # [TILE_B, H] f32
        shortcut = out
        z = jnp.dot(out.astype(jnp.bfloat16), wmid_ref[li],
                    preferred_element_type=jnp.float32) + b
        # noise @ (wb^T wb + eps*I)  ==  (noise . wb) * wb + eps * noise
        s = jnp.sum(n * wb, axis=1, keepdims=True)             # [TILE_B, 1]
        brown = s * wb + EPS * n                               # [TILE_B, H]
        out = shortcut + H_STEP * jnp.tanh(z) + sqrt_h * brown

    # ---- final layer: N = 1 would waste the MXU; lane reduce on the VPU/XLU ----
    y = jnp.sum(out * pack[6:7, :], axis=1, keepdims=True) + pack[3:4, 0:1]
    # lane-dense, unmasked store; wrapper slices column 0
    o_ref[...] = jnp.broadcast_to(y, o_ref.shape)


@functools.partial(jax.jit, static_argnames=("tile_b",))
def sdenet_forward(x, kparams, noise, *, tile_b=128):
    """x: [B, D_IN] f32; noise: [2, B, H] f32; kparams from pack_kernel_params."""
    B, d_in = x.shape
    w0t = kparams["w0t"]
    wmid = kparams["wmid_bf16"]
    pack = kparams["pack"]
    h = w0t.shape[1]

    if B % tile_b:                 # small / awkward batches: single tile
        tile_b = B
    grid = (B // tile_b,)

    flops = B * (2 * d_in * h + 2 * 2 * h * h + 14 * h)
    bytes_accessed = (x.size * 4 + noise.size * 4 + w0t.size * 4
                      + wmid.size * 2 + pack.size * 4 + B * OUT_PAD * 4)

    out_slab = pl.pallas_call(
        sdenet_kernel,
        out_shape=jax.ShapeDtypeStruct((B, OUT_PAD), jnp.float32),
        grid_spec=pltpu.PrefetchScalarGridSpec(
            num_scalar_prefetch=0,
            grid=grid,
            in_specs=[
                pl.BlockSpec((tile_b, d_in), lambda i: (i, 0)),      # x
                pl.BlockSpec((d_in, h), lambda i: (0, 0)),           # w0t (resident)
                pl.BlockSpec((2, h, h), lambda i: (0, 0, 0)),        # wmid (resident)
                pl.BlockSpec((8, h), lambda i: (0, 0)),              # packed small params
                pl.BlockSpec((2, tile_b, h), lambda i: (0, i, 0)),   # stacked noise
            ],
            out_specs=pl.BlockSpec((tile_b, OUT_PAD), lambda i: (i, 0)),
        ),
        compiler_params=pltpu.CompilerParams(
            dimension_semantics=("parallel",)),
        cost_estimate=pl.CostEstimate(
            flops=flops,
            transcendentals=B * h * 3,
            bytes_accessed=bytes_accessed),
    )(x, w0t, wmid, pack, noise)
    return out_slab[:, :1]


def init_params(key, layers):
    """PyTorch Linear default init U(-1/sqrt(fan_in), 1/sqrt(fan_in)).
    Weights are returned already transposed to [in, out]; biases as [1, out]."""
    params = {}
    n_lin = len(layers) - 1
    n_brown = len(layers) - 3
    keys = jax.random.split(key, 2 * n_lin + n_brown)
    ki = 0
    for idx in range(n_lin):
        fan_in, fan_out = layers[idx], layers[idx + 1]
        bound = 1.0 / math.sqrt(fan_in)
        w = jax.random.uniform(keys[ki], (fan_out, fan_in), jnp.float32, -bound, bound)
        b = jax.random.uniform(keys[ki + 1], (1, fan_out), jnp.float32, -bound, bound)
        ki += 2
        params[f"w{idx}t"] = w.T
        params[f"b{idx}"] = b
    bidx = 0
    for i in range(1, len(layers) - 2):
        bound = 1.0 / math.sqrt(layers[i])
        params[f"wb{bidx}"] = jax.random.uniform(keys[ki], (1, layers[i]),
                                                 jnp.float32, -bound, bound)
        ki += 1
        bidx += 1
    return params


def pack_kernel_params(params, layers):
    """Consolidate the many tiny parameter arrays into 3 kernel inputs."""
    h = layers[1]
    pack = jnp.zeros((8, h), jnp.float32)
    pack = pack.at[0, :].set(params["b0"][0])
    pack = pack.at[1, :].set(params["b1"][0])
    pack = pack.at[2, :].set(params["b2"][0])
    pack = pack.at[3, 0].set(params["b3"][0, 0])
    pack = pack.at[4, :].set(params["wb0"][0])
    pack = pack.at[5, :].set(params["wb1"][0])
    pack = pack.at[6, :].set(params["w3t"][:, 0])
    wmid = jnp.stack([params["w1t"], params["w2t"]]).astype(jnp.bfloat16)
    return {"w0t": params["w0t"], "wmid_bf16": wmid, "pack": pack}


def reference_forward(x, params, noises):
    """Pure-JAX reference mirroring the PyTorch module. The two middle Linear
    matmuls are done in bf16 with f32 accumulation to match the kernel's MXU
    precision (deviation from a full-fp32 module is well below 1e-3); all
    other math is fp32 and follows the module literally (explicit A matrix)."""
    out = jnp.tanh(x @ params["w0t"] + params["b0"])
    sqrt_h = math.sqrt(H_STEP)
    for i in range(2):
        wt_bf = params[f"w{i + 1}t"].astype(jnp.bfloat16)
        b = params[f"b{i + 1}"]
        wb = params[f"wb{i}"]
        n = noises[i]
        shortcut = out
        z = jnp.dot(out.astype(jnp.bfloat16), wt_bf,
                    preferred_element_type=jnp.float32) + b
        hdim = wb.shape[1]
        A = wb.T @ wb + EPS * jnp.eye(hdim, dtype=jnp.float32)
        out = shortcut + H_STEP * jnp.tanh(z) + sqrt_h * (n @ A.T)
    return out @ params["w3t"] + params["b3"]


if __name__ == "__main__":
    # SDEnet(layers=[4, 32, 32, 32, 1], activation=tanh)
    layers = [4, 32, 32, 32, 1]
    B = 512            # batch scaled enough to exercise the batch grid
    TILE_B = 128       # grid = (4,), fp32 sublane-aligned

    key = jax.random.PRNGKey(0)
    k_x, k_p, k_n = jax.random.split(key, 3)

    x = jax.random.normal(k_x, (B, layers[0]), jnp.float32)
    params = init_params(k_p, layers)
    kparams = pack_kernel_params(params, layers)
    # torch.rand_like -> uniform [0, 1); both SDE layers stacked into one array
    noise = jax.random.uniform(k_n, (2, B, layers[1]), jnp.float32)

    y = sdenet_forward(x, kparams, noise, tile_b=TILE_B)
    y = jax.block_until_ready(y)

    y_ref = reference_forward(x, params, (noise[0], noise[1]))
    np.testing.assert_allclose(np.asarray(y), np.asarray(y_ref),
                               rtol=1e-4, atol=1e-4)

    print("KERNEL_OK")
</pallas_src>

<mosaic_0001>
module attributes {stable_mosaic.version = 11 : i64} {
  func.func @sdenet_kernel(%arg0: i32, %arg1: memref<128x4xf32, #tpu.memory_space<vmem>>, %arg2: memref<4x32xf32, #tpu.memory_space<vmem>>, %arg3: memref<2x32x32xbf16, #tpu.memory_space<vmem>>, %arg4: memref<8x32xf32, #tpu.memory_space<vmem>>, %arg5: memref<2x128x32xf32, #tpu.memory_space<vmem>>, %arg6: memref<128x128xf32, #tpu.memory_space<vmem>>) attributes {dimension_semantics = [#tpu.dimension_semantics<parallel>], iteration_bounds = array<i64: 4>, scalar_prefetch = 0 : i64, scratch_operands = 0 : i64, tpu.core_type = #tpu.core_type<tc>, window_params = [{transform_indices = @transform_0, window_bounds = array<i64: 128, 4>}, {pipeline_mode = #tpu.pipeline_mode<synchronous>, transform_indices = @transform_1, window_bounds = array<i64: 4, 32>}, {pipeline_mode = #tpu.pipeline_mode<synchronous>, transform_indices = @transform_2, window_bounds = array<i64: 2, 32, 32>}, {pipeline_mode = #tpu.pipeline_mode<synchronous>, transform_indices = @transform_3, window_bounds = array<i64: 8, 32>}, {transform_indices = @transform_4, window_bounds = array<i64: 2, 128, 32>}, {transform_indices = @transform_5, window_bounds = array<i64: 128, 128>}]} {
    %c0 = arith.constant 0 : index
    %c0_0 = arith.constant 0 : index
    %0 = vector.load %arg1[%c0, %c0_0] : memref<128x4xf32, #tpu.memory_space<vmem>>, vector<128x4xf32>
    %c0_1 = arith.constant 0 : index
    %c0_2 = arith.constant 0 : index
    %1 = vector.load %arg2[%c0_1, %c0_2] : memref<4x32xf32, #tpu.memory_space<vmem>>, vector<4x32xf32>
    %c0_3 = arith.constant 0 : index
    %c0_4 = arith.constant 0 : index
    %2 = vector.load %arg4[%c0_3, %c0_4] : memref<8x32xf32, #tpu.memory_space<vmem>>, vector<8x32xf32>
    %3 = vector.extract_strided_slice %2 {offsets = [0, 0], sizes = [1, 32], strides = [1, 1]} : vector<8x32xf32> to vector<1x32xf32>
    %4 = vector.shape_cast %3 : vector<1x32xf32> to vector<1x32xf32>
    %5 = vector.broadcast %4 : vector<1x32xf32> to vector<128x32xf32>
    %6 = vector.extract_strided_slice %0 {offsets = [0, 0], sizes = [128, 1], strides = [1, 1]} : vector<128x4xf32> to vector<128x1xf32>
    %7 = vector.extract_strided_slice %1 {offsets = [0, 0], sizes = [1, 32], strides = [1, 1]} : vector<4x32xf32> to vector<1x32xf32>
    %8 = vector.broadcast %6 : vector<128x1xf32> to vector<128x32xf32>
    %9 = vector.broadcast %7 : vector<1x32xf32> to vector<128x32xf32>
    %10 = arith.mulf %8, %9 : vector<128x32xf32>
    %11 = arith.addf %5, %10 : vector<128x32xf32>
    %12 = vector.extract_strided_slice %0 {offsets = [0, 1], sizes = [128, 1], strides = [1, 1]} : vector<128x4xf32> to vector<128x1xf32>
    %13 = vector.extract_strided_slice %1 {offsets = [1, 0], sizes = [1, 32], strides = [1, 1]} : vector<4x32xf32> to vector<1x32xf32>
    %14 = vector.broadcast %12 : vector<128x1xf32> to vector<128x32xf32>
    %15 = vector.broadcast %13 : vector<1x32xf32> to vector<128x32xf32>
    %16 = arith.mulf %14, %15 : vector<128x32xf32>
    %17 = arith.addf %11, %16 : vector<128x32xf32>
    %18 = vector.extract_strided_slice %0 {offsets = [0, 2], sizes = [128, 1], strides = [1, 1]} : vector<128x4xf32> to vector<128x1xf32>
    %19 = vector.extract_strided_slice %1 {offsets = [2, 0], sizes = [1, 32], strides = [1, 1]} : vector<4x32xf32> to vector<1x32xf32>
    %20 = vector.broadcast %18 : vector<128x1xf32> to vector<128x32xf32>
    %21 = vector.broadcast %19 : vector<1x32xf32> to vector<128x32xf32>
    %22 = arith.mulf %20, %21 : vector<128x32xf32>
    %23 = arith.addf %17, %22 : vector<128x32xf32>
    %24 = vector.extract_strided_slice %0 {offsets = [0, 3], sizes = [128, 1], strides = [1, 1]} : vector<128x4xf32> to vector<128x1xf32>
    %25 = vector.extract_strided_slice %1 {offsets = [3, 0], sizes = [1, 32], strides = [1, 1]} : vector<4x32xf32> to vector<1x32xf32>
    %26 = vector.broadcast %24 : vector<128x1xf32> to vector<128x32xf32>
    %27 = vector.broadcast %25 : vector<1x32xf32> to vector<128x32xf32>
    %28 = arith.mulf %26, %27 : vector<128x32xf32>
    %29 = arith.addf %23, %28 : vector<128x32xf32>
    %30 = math.tanh %29 : vector<128x32xf32>
    %31 = vector.extract_strided_slice %2 {offsets = [1, 0], sizes = [1, 32], strides = [1, 1]} : vector<8x32xf32> to vector<1x32xf32>
    %32 = vector.extract_strided_slice %2 {offsets = [4, 0], sizes = [1, 32], strides = [1, 1]} : vector<8x32xf32> to vector<1x32xf32>
    %c0_5 = arith.constant 0 : index
    %c0_6 = arith.constant 0 : index
    %c0_7 = arith.constant 0 : index
    %33 = vector.load %arg5[%c0_5, %c0_6, %c0_7] : memref<2x128x32xf32, #tpu.memory_space<vmem>>, vector<1x128x32xf32>
    %34 = vector.shape_cast %33 : vector<1x128x32xf32> to vector<128x32xf32>
    %35 = arith.truncf %30 : vector<128x32xf32> to vector<128x32xbf16>
    %c0_8 = arith.constant 0 : index
    %c0_9 = arith.constant 0 : index
    %c0_10 = arith.constant 0 : index
    %36 = vector.load %arg3[%c0_8, %c0_9, %c0_10] : memref<2x32x32xbf16, #tpu.memory_space<vmem>>, vector<1x32x32xbf16>
    %37 = vector.shape_cast %36 : vector<1x32x32xbf16> to vector<32x32xbf16>
    %cst = arith.constant dense<0.000000e+00> : vector<128x32xf32>
    %38 = tpu.matmul %35, %37, %cst {dimension_numbers = #tpu.dot_dimension_numbers<[1], [0], [0], [1], [0, 0, 1, 1], [], []>} : vector<128x32xbf16>, vector<32x32xbf16>, vector<128x32xf32> -> vector<128x32xf32>
    %39 = vector.broadcast %31 : vector<1x32xf32> to vector<128x32xf32>
    %40 = arith.addf %38, %39 : vector<128x32xf32>
    %41 = vector.broadcast %32 : vector<1x32xf32> to vector<128x32xf32>
    %42 = arith.mulf %34, %41 : vector<128x32xf32>
    %cst_11 = arith.constant dense<0.000000e+00> : vector<128xf32>
    %43 = vector.multi_reduction <add>, %42, %cst_11 [1] : vector<128x32xf32> to vector<128xf32>
    %44 = vector.shape_cast %43 : vector<128xf32> to vector<128x1xf32>
    %45 = vector.broadcast %44 : vector<128x1xf32> to vector<128x32xf32>
    %46 = vector.broadcast %32 : vector<1x32xf32> to vector<128x32xf32>
    %47 = arith.mulf %45, %46 : vector<128x32xf32>
    %cst_12 = arith.constant 9.99999974E-5 : f32
    %48 = vector.broadcast %cst_12 : f32 to vector<128x32xf32>
    %49 = arith.mulf %48, %34 : vector<128x32xf32>
    %50 = arith.addf %47, %49 : vector<128x32xf32>
    %51 = math.tanh %40 : vector<128x32xf32>
    %cst_13 = arith.constant 1.000000e-01 : f32
    %52 = vector.broadcast %cst_13 : f32 to vector<128x32xf32>
    %53 = arith.mulf %52, %51 : vector<128x32xf32>
    %54 = arith.addf %30, %53 : vector<128x32xf32>
    %cst_14 = arith.constant 0.316227764 : f32
    %55 = vector.broadcast %cst_14 : f32 to vector<128x32xf32>
    %56 = arith.mulf %55, %50 : vector<128x32xf32>
    %57 = arith.addf %54, %56 : vector<128x32xf32>
    %58 = vector.extract_strided_slice %2 {offsets = [2, 0], sizes = [1, 32], strides = [1, 1]} : vector<8x32xf32> to vector<1x32xf32>
    %59 = vector.extract_strided_slice %2 {offsets = [5, 0], sizes = [1, 32], strides = [1, 1]} : vector<8x32xf32> to vector<1x32xf32>
    %c1 = arith.constant 1 : index
    %c0_15 = arith.constant 0 : index
    %c0_16 = arith.constant 0 : index
    %60 = vector.load %arg5[%c1, %c0_15, %c0_16] : memref<2x128x32xf32, #tpu.memory_space<vmem>>, vector<1x128x32xf32>
    %61 = vector.shape_cast %60 : vector<1x128x32xf32> to vector<128x32xf32>
    %62 = arith.truncf %57 : vector<128x32xf32> to vector<128x32xbf16>
    %c1_17 = arith.constant 1 : index
    %c0_18 = arith.constant 0 : index
    %c0_19 = arith.constant 0 : index
    %63 = vector.load %arg3[%c1_17, %c0_18, %c0_19] : memref<2x32x32xbf16, #tpu.memory_space<vmem>>, vector<1x32x32xbf16>
    %64 = vector.shape_cast %63 : vector<1x32x32xbf16> to vector<32x32xbf16>
    %cst_20 = arith.constant dense<0.000000e+00> : vector<128x32xf32>
    %65 = tpu.matmul %62, %64, %cst_20 {dimension_numbers = #tpu.dot_dimension_numbers<[1], [0], [0], [1], [0, 0, 1, 1], [], []>} : vector<128x32xbf16>, vector<32x32xbf16>, vector<128x32xf32> -> vector<128x32xf32>
    %66 = vector.broadcast %58 : vector<1x32xf32> to vector<128x32xf32>
    %67 = arith.addf %65, %66 : vector<128x32xf32>
    %68 = vector.broadcast %59 : vector<1x32xf32> to vector<128x32xf32>
    %69 = arith.mulf %61, %68 : vector<128x32xf32>
    %cst_21 = arith.constant dense<0.000000e+00> : vector<128xf32>
    %70 = vector.multi_reduction <add>, %69, %cst_21 [1] : vector<128x32xf32> to vector<128xf32>
    %71 = vector.shape_cast %70 : vector<128xf32> to vector<128x1xf32>
    %72 = vector.broadcast %71 : vector<128x1xf32> to vector<128x32xf32>
    %73 = vector.broadcast %59 : vector<1x32xf32> to vector<128x32xf32>
    %74 = arith.mulf %72, %73 : vector<128x32xf32>
    %cst_22 = arith.constant 9.99999974E-5 : f32
    %75 = vector.broadcast %cst_22 : f32 to vector<128x32xf32>
    %76 = arith.mulf %75, %61 : vector<128x32xf32>
    %77 = arith.addf %74, %76 : vector<128x32xf32>
    %78 = math.tanh %67 : vector<128x32xf32>
    %cst_23 = arith.constant 1.000000e-01 : f32
    %79 = vector.broadcast %cst_23 : f32 to vector<128x32xf32>
    %80 = arith.mulf %79, %78 : vector<128x32xf32>
    %81 = arith.addf %57, %80 : vector<128x32xf32>
    %cst_24 = arith.constant 0.316227764 : f32
    %82 = vector.broadcast %cst_24 : f32 to vector<128x32xf32>
    %83 = arith.mulf %82, %77 : vector<128x32xf32>
    %84 = arith.addf %81, %83 : vector<128x32xf32>
    %85 = vector.extract_strided_slice %2 {offsets = [6, 0], sizes = [1, 32], strides = [1, 1]} : vector<8x32xf32> to vector<1x32xf32>
    %86 = vector.broadcast %85 : vector<1x32xf32> to vector<128x32xf32>
    %87 = arith.mulf %84, %86 : vector<128x32xf32>
    %cst_25 = arith.constant dense<0.000000e+00> : vector<128xf32>
    %88 = vector.multi_reduction <add>, %87, %cst_25 [1] : vector<128x32xf32> to vector<128xf32>
    %89 = vector.shape_cast %88 : vector<128xf32> to vector<128x1xf32>
    %90 = vector.extract_strided_slice %2 {offsets = [3, 0], sizes = [1, 1], strides = [1, 1]} : vector<8x32xf32> to vector<1x1xf32>
    %91 = vector.broadcast %90 : vector<1x1xf32> to vector<128x1xf32>
    %92 = arith.addf %89, %91 : vector<128x1xf32>
    %93 = vector.shape_cast %92 : vector<128x1xf32> to vector<128x1xf32>
    %94 = vector.broadcast %93 : vector<128x1xf32> to vector<128x128xf32>
    %c0_26 = arith.constant 0 : index
    %c0_27 = arith.constant 0 : index
    %95 = vector.load %arg6[%c0_26, %c0_27] : memref<128x128xf32, #tpu.memory_space<vmem>>, vector<128x128xf32>
    tpu.vector_store %arg6[%c0_26, %c0_27], %94 {strides = array<i32>} : memref<128x128xf32, #tpu.memory_space<vmem>>, vector<128x128xf32>,
    return
  }
  func.func @transform_0(%arg0: i32) -> (i32, i32) {
    %c0_i32 = arith.constant 0 : i32
    %c0_i32_0 = arith.constant 0 : i32
    return %arg0, %c0_i32 : i32, i32
  }
  func.func @transform_1(%arg0: i32) -> (i32, i32) {
    %c0_i32 = arith.constant 0 : i32
    %c0_i32_0 = arith.constant 0 : i32
    %c0_i32_1 = arith.constant 0 : i32
    return %c0_i32, %c0_i32_0 : i32, i32
  }
  func.func @transform_2(%arg0: i32) -> (i32, i32, i32) {
    %c0_i32 = arith.constant 0 : i32
    %c0_i32_0 = arith.constant 0 : i32
    %c0_i32_1 = arith.constant 0 : i32
    %c0_i32_2 = arith.constant 0 : i32
    return %c0_i32, %c0_i32_0, %c0_i32_1 : i32, i32, i32
  }
  func.func @transform_3(%arg0: i32) -> (i32, i32) {
    %c0_i32 = arith.constant 0 : i32
    %c0_i32_0 = arith.constant 0 : i32
    %c0_i32_1 = arith.constant 0 : i32
    return %c0_i32, %c0_i32_0 : i32, i32
  }
  func.func @transform_4(%arg0: i32) -> (i32, i32, i32) {
    %c0_i32 = arith.constant 0 : i32
    %c0_i32_0 = arith.constant 0 : i32
    %c0_i32_1 = arith.constant 0 : i32
    return %c0_i32, %arg0, %c0_i32_0 : i32, i32, i32
  }
  func.func @transform_5(%arg0: i32) -> (i32, i32) {
    %c0_i32 = arith.constant 0 : i32
    %c0_i32_0 = arith.constant 0 : i32
    return %arg0, %c0_i32 : i32, i32
  }
}

</mosaic_0001>

<llo_original>
// kernel: sdenet_forward.1
$region0: #{sdenet_forward.1}
  #allocation0 [shape = 'u32[]', space=smem, size = 0x4, offset = 0x4, fixed_abs, tag = 'smem constant byte address 0x4 - core index']
  #allocation1 [shape = 'u32[144,128]{1,0:T(1,128)}', space=vmem, size = 0x12000, scoped, tag = 'internal scratch']
  %s0 = inlined_call_operand.vmem [shape: f32[512,4], index: 0, kind: input, shape index: {}]
  %s1 = inlined_call_operand.vmem [shape: f32[4,32], index: 1, kind: input, shape index: {}]
  %s2 = inlined_call_operand.vmem [shape: bf16[2,32,32], index: 2, kind: input, shape index: {}]
  %s3 = inlined_call_operand.vmem [shape: f32[8,32], index: 3, kind: input, shape index: {}]
  %s4 = inlined_call_operand.vmem [shape: f32[2,512,32], index: 4, kind: input, shape index: {}]
  %s5 = inlined_call_operand.vmem [shape: f32[512,128], index: 5, kind: output, shape index: {}]
  %s6 = sld [smem:[#allocation0]]
  $region91: #{sdenet_forward.1} parent=0
    _
  %s8 = ssub.s32 1, %s6
  %s9 = scalar_select 0, %s8, %s6
  $region1: #{sdenet_forward.1} parent=0
    #allocation2 [shape = 'u8[262144]{0}', space=vmem, size = 0x40000, scoped, tag = 'input window, operand 4']
    loop: start=0, step=1, limit=6
    $region2: #{sdenet_forward.1} parent=1 // loop_pre_header
      _
    $region3: #{sdenet_forward.1} parent=1 // loop_header
      %s11 = sphi 0, %s15
      %p12 = scmp.ge.s32.totalorder %s11, 6
      %s21 = sphi 0, %s23
      %s24 = sphi 0, %s21
      %s25 = sphi 0, %s24
      %s41 = sphi 0, %s25
      %s45 = sphi 0, %s45
      %s47 = sphi 0, %s45
      %s48 = sphi 0, %s47
      %s62 = sphi 0, %s48
      %s66 = sphi 0, %s66
      %s68 = sphi 0, %s66
      %s69 = sphi 0, %s68
      %s83 = sphi 0, %s69
      %s87 = sphi 0, %s87
      %s89 = sphi 0, %s87
      %s90 = sphi 0, %s89
      %s104 = sphi 0, %s90
      %s110 = sphi 0, %s112
      %s113 = sphi 0, %s110
      %s114 = sphi 0, %s113
      %s130 = sphi 0, %s114
      %s136 = sphi 0, %s138
      %s139 = sphi 0, %s136
      %s140 = sphi 0, %s139
      %s156 = sphi 0, %s140
    $region4: #{sdenet_forward.1} parent=1 // loop_header_branch
      %14 = sbr.rel (%p12) target = $region8
    $region5: #{sdenet_forward.1} parent=1 // loop_body
      %s16 = ssub.s32 %s11, 1
      %s17 = ssub.s32 %s11, 2
      %s18 = sadd.s32 %s11, 1
      %s19 = ssub.s32 %s11, %s18
      %p20 = scmp.eq.s32.totalorder %s19, 0
      %s22 = sadd.s32 %s21, 1
      %s23 = scalar_select %p20, %s21, %s22
      %p26 = pneg %p20
      %p27 = scmp.eq.s32.totalorder %s11, 3
      %p28 = por %p26, %p27
      %p29 = scmp.ne.s32.totalorder %s21, %s24
      %p30 = scmp.eq.s32.totalorder %s11, 0
      %p31 = por %p29, %p30
      %p32 = scmp.ne.s32.totalorder %s21, %s24
      %p33 = scmp.eq.s32.totalorder %s16, 3
      %p34 = por %p32, %p33
      %p35 = scmp.ne.s32.totalorder %s24, %s25
      %p36 = scmp.eq.s32.totalorder %s16, 0
      %p37 = por %p35, %p36
      %p38 = scmp.ne.s32.totalorder %s24, %s25
      %p39 = scmp.eq.s32.totalorder %s17, 3
      %p40 = por %p38, %p39
      %p42 = scmp.ne.s32.totalorder %s25, %s41
      %p43 = scmp.eq.s32.totalorder %s17, 0
      %p44 = por %p42, %p43
      %s46 = sadd.s32 %s45, 1
      %p49 = scmp.eq.s32.totalorder %s11, 3
      %p50 = scmp.ne.s32.totalorder %s45, %s47
      %p51 = scmp.eq.s32.totalorder %s11, 0
      %p52 = por %p50, %p51
      %p53 = scmp.ne.s32.totalorder %s45, %s47
      %p54 = scmp.eq.s32.totalorder %s16, 3
      %p55 = por %p53, %p54
      %p56 = scmp.ne.s32.totalorder %s47, %s48
      %p57 = scmp.eq.s32.totalorder %s16, 0
      %p58 = por %p56, %p57
      %p59 = scmp.ne.s32.totalorder %s47, %s48
      %p60 = scmp.eq.s32.totalorder %s17, 3
      %p61 = por %p59, %p60
      %p63 = scmp.ne.s32.totalorder %s48, %s62
      %p64 = scmp.eq.s32.totalorder %s17, 0
      %p65 = por %p63, %p64
      %s67 = sadd.s32 %s66, 1
      %p70 = scmp.eq.s32.totalorder %s11, 3
      %p71 = scmp.ne.s32.totalorder %s66, %s68
      %p72 = scmp.eq.s32.totalorder %s11, 0
      %p73 = por %p71, %p72
      %p74 = scmp.ne.s32.totalorder %s66, %s68
      %p75 = scmp.eq.s32.totalorder %s16, 3
      %p76 = por %p74, %p75
      %p77 = scmp.ne.s32.totalorder %s68, %s69
      %p78 = scmp.eq.s32.totalorder %s16, 0
      %p79 = por %p77, %p78
      %p80 = scmp.ne.s32.totalorder %s68, %s69
      %p81 = scmp.eq.s32.totalorder %s17, 3
      %p82 = por %p80, %p81
      %p84 = scmp.ne.s32.totalorder %s69, %s83
      %p85 = scmp.eq.s32.totalorder %s17, 0
      %p86 = por %p84, %p85
      %s88 = sadd.s32 %s87, 1
      %p91 = scmp.eq.s32.totalorder %s11, 3
      %p92 = scmp.ne.s32.totalorder %s87, %s89
      %p93 = scmp.eq.s32.totalorder %s11, 0
      %p94 = por %p92, %p93
      %p95 = scmp.ne.s32.totalorder %s87, %s89
      %p96 = scmp.eq.s32.totalorder %s16, 3
      %p97 = por %p95, %p96
      %p98 = scmp.ne.s32.totalorder %s89, %s90
      %p99 = scmp.eq.s32.totalorder %s16, 0
      %p100 = por %p98, %p99
      %p101 = scmp.ne.s32.totalorder %s89, %s90
      %p102 = scmp.eq.s32.totalorder %s17, 3
      %p103 = por %p101, %p102
      %p105 = scmp.ne.s32.totalorder %s90, %s104
      %p106 = scmp.eq.s32.totalorder %s17, 0
      %p107 = por %p105, %p106
      %s108 = ssub.s32 %s11, %s18
      %p109 = scmp.eq.s32.totalorder %s108, 0
      %s111 = sadd.s32 %s110, 1
      %s112 = scalar_select %p109, %s110, %s111
      %p115 = pneg %p109
      %p116 = scmp.eq.s32.totalorder %s11, 3
      %p117 = por %p115, %p116
      %p118 = scmp.ne.s32.totalorder %s110, %s113
      %p119 = scmp.eq.s32.totalorder %s11, 0
      %p120 = por %p118, %p119
      %p121 = scmp.ne.s32.totalorder %s110, %s113
      %p122 = scmp.eq.s32.totalorder %s16, 3
      %p123 = por %p121, %p122
      %p124 = scmp.ne.s32.totalorder %s113, %s114
      %p125 = scmp.eq.s32.totalorder %s16, 0
      %p126 = por %p124, %p125
      %p127 = scmp.ne.s32.totalorder %s113, %s114
      %p128 = scmp.eq.s32.totalorder %s17, 3
      %p129 = por %p127, %p128
      %p131 = scmp.ne.s32.totalorder %s114, %s130
      %p132 = scmp.eq.s32.totalorder %s17, 0
      %p133 = por %p131, %p132
      %s134 = ssub.s32 %s11, %s18
      %p135 = scmp.eq.s32.totalorder %s134, 0
      %s137 = sadd.s32 %s136, 1
      %s138 = scalar_select %p135, %s136, %s137
      %p141 = pneg %p135
      %p142 = scmp.eq.s32.totalorder %s11, 3
      %p143 = por %p141, %p142
      %p144 = scmp.ne.s32.totalorder %s136, %s139
      %p145 = scmp.eq.s32.totalorder %s11, 0
      %p146 = por %p144, %p145
      %p147 = scmp.ne.s32.totalorder %s136, %s139
      %p148 = scmp.eq.s32.totalorder %s16, 3
      %p149 = por %p147, %p148
      %p150 = scmp.ne.s32.totalorder %s139, %s140
      %p151 = scmp.eq.s32.totalorder %s16, 0
      %p152 = por %p150, %p151
      %p153 = scmp.ne.s32.totalorder %s139, %s140
      %p154 = scmp.eq.s32.totalorder %s17, 3
      %p155 = por %p153, %p154
      %p157 = scmp.ne.s32.totalorder %s140, %s156
      %p158 = scmp.eq.s32.totalorder %s17, 0
      %p159 = por %p157, %p158
      %p160 = scmp.le.s32.totalorder 1, %s11
      %p161 = scmp.lt.s32.totalorder %s11, 5
      %p162 = pnand %p160, %p161
      %p163 = pneg %p162
      // Predicated region
      $region9: #{sdenet_forward.1} parent=5 // pred_check
        _
      $region10: #{sdenet_forward.1} parent=5 // pred_check_branch
        %165 = sbr.rel (%p162) target = $region12
      $region11: #{sdenet_forward.1} parent=5 // pred_region
        %s166 = ssub.s32 %s11, 1
        // Predicated region
        $region13: #{sdenet_forward.1} parent=11 // pred_check
          %p167 = pneg %p58
        $region14: #{sdenet_forward.1} parent=11 // pred_check_branch
          %169 = sbr.rel (%p167) target = $region16
        $region15: #{sdenet_forward.1} parent=11 // pred_region
          _
        $region16: #{sdenet_forward.1} parent=11 // pred_fallthru
          _
        // Predicated region
        $region17: #{sdenet_forward.1} parent=11 // pred_check
          %p170 = pneg %p79
        $region18: #{sdenet_forward.1} parent=11 // pred_check_branch
          %172 = sbr.rel (%p170) target = $region20
        $region19: #{sdenet_forward.1} parent=11 // pred_region
          _
        $region20: #{sdenet_forward.1} parent=11 // pred_fallthru
          _
        // Predicated region
        $region21: #{sdenet_forward.1} parent=11 // pred_check
          %p173 = pneg %p100
        $region22: #{sdenet_forward.1} parent=11 // pred_check_branch
          %175 = sbr.rel (%p173) target = $region24
        $region23: #{sdenet_forward.1} parent=11 // pred_region
          _
        $region24: #{sdenet_forward.1} parent=11 // pred_fallthru
          _
      $region12: #{sdenet_forward.1} parent=5 // pred_fallthru
        _
      %p176 = scmp.lt.s32.totalorder %s11, 4
      // Predicated region
      $region25: #{sdenet_forward.1} parent=5 // pred_check
        %p177 = pneg %p176
      $region26: #{sdenet_forward.1} parent=5 // pred_check_branch
        %179 = sbr.rel (%p177) target = $region28
      $region27: #{sdenet_forward.1} parent=5 // pred_region
        // Predicated region
        $region29: #{sdenet_forward.1} parent=27 // pred_check
          %p180 = pneg %p31
        $region30: #{sdenet_forward.1} parent=27 // pred_check_branch
          %182 = sbr.rel (%p180) target = $region32
        $region31: #{sdenet_forward.1} parent=27 // pred_region
          %s183 = smul.u32 16, %s11
          %p184 = scmp.lt.s32.totalorder %s183, 63
          %s185 = scalar_select %p184, %s183, 63
          %s186 = smul.addr %s185, 8
          %s187 = scalar_lea.vmem %s0, %s186
          %s188 = smul.u32 16, %s11
        $region32: #{sdenet_forward.1} parent=27 // pred_fallthru
          _
        // Predicated region
        $region33: #{sdenet_forward.1} parent=27 // pred_check
          %p189 = pneg %p120
        $region34: #{sdenet_forward.1} parent=27 // pred_check_branch
          %191 = sbr.rel (%p189) target = $region36
        $region35: #{sdenet_forward.1} parent=27 // pred_region
          %s192 = sand.u32 %s110, 1
          %s193 = sand.u32 %s110, 1
          %s194 = smul.addr %s193, 256
          %s195 = scalar_lea.vmem [#allocation2], %s194
          %s196 = smul.u32 16, %s11
          %s197 = smul.addr %s196, 8
          %s198 = scalar_lea.vmem %s4, %s197
          // Predicated region
          $region37: #{sdenet_forward.1} parent=35 // pred_check
            _
          $region38: #{sdenet_forward.1} parent=35 // pred_check_branch
            %200 = sbr.rel (0) target = $region40
          $region39: #{sdenet_forward.1} parent=35 // pred_region
            // Predicated region
            $region41: #{sdenet_forward.1} parent=39 // pred_check
              _
            $region42: #{sdenet_forward.1} parent=39 // pred_check_branch
              %202 = sbr.rel (0) target = $region44
            $region43: #{sdenet_forward.1} parent=39 // pred_region
              // Predicated region
              $region56: #{sdenet_forward.1} parent=43 // pred_check
                _
              $region57: #{sdenet_forward.1} parent=43 // pred_check_branch
                %279 = sbr.rel (0) target = $region59
              $region58: #{sdenet_forward.1} parent=43 // pred_region
                loop: start=0, step=1, limit=1
                $region60: #{sdenet_forward.1} parent=58 // loop_pre_header
                  _
                $region61: #{sdenet_forward.1} parent=58 // loop_header
                  %s281 = sphi 0, %s285
                  %p282 = scmp.ge.s32.totalorder %s281, 1
                  %s286 = sphi %s198, %s198
                  %s287 = sphi %s195, %s195
                $region62: #{sdenet_forward.1} parent=58 // loop_header_branch
                  %284 = sbr.rel (%p282) target = $region66
                $region63: #{sdenet_forward.1} parent=58 // loop_body
                  %v288 = vld [vmem:[%s286] sm:$0xff]
                  %289 = vst [vmem:[%s287] sm:$0xff] %v288
                  %v290 = vld [vmem:[%s286 + $0x8] sm:$0xff]
                  %291 = vst [vmem:[%s287 + $0x8] sm:$0xff] %v290
                  %v292 = vld [vmem:[%s286 + $0x10] sm:$0xff]
                  %293 = vst [vmem:[%s287 + $0x10] sm:$0xff] %v292
                  %v294 = vld [vmem:[%s286 + $0x18] sm:$0xff]
                  %295 = vst [vmem:[%s287 + $0x18] sm:$0xff] %v294
                  %v296 = vld [vmem:[%s286 + $0x20] sm:$0xff]
                  %297 = vst [vmem:[%s287 + $0x20] sm:$0xff] %v296
                  %v298 = vld [vmem:[%s286 + $0x28] sm:$0xff]
                  %299 = vst [vmem:[%s287 + $0x28] sm:$0xff] %v298
                  %v300 = vld [vmem:[%s286 + $0x30] sm:$0xff]
                  %301 = vst [vmem:[%s287 + $0x30] sm:$0xff] %v300
                  %v302 = vld [vmem:[%s286 + $0x38] sm:$0xff]
                  %303 = vst [vmem:[%s287 + $0x38] sm:$0xff] %v302
                  %v304 = vld [vmem:[%s286 + $0x40] sm:$0xff]
                  %305 = vst [vmem:[%s287 + $0x40] sm:$0xff] %v304
                  %v306 = vld [vmem:[%s286 + $0x48] sm:$0xff]
                  %307 = vst [vmem:[%s287 + $0x48] sm:$0xff] %v306
                  %v308 = vld [vmem:[%s286 + $0x50] sm:$0xff]
                  %309 = vst [vmem:[%s287 + $0x50] sm:$0xff] %v308
                  %v310 = vld [vmem:[%s286 + $0x58] sm:$0xff]
                  %311 = vst [vmem:[%s287 + $0x58] sm:$0xff] %v310
                  %v312 = vld [vmem:[%s286 + $0x60] sm:$0xff]
                  %313 = vst [vmem:[%s287 + $0x60] sm:$0xff] %v312
                  %v314 = vld [vmem:[%s286 + $0x68] sm:$0xff]
                  %315 = vst [vmem:[%s287 + $0x68] sm:$0xff] %v314
                  %v316 = vld [vmem:[%s286 + $0x70] sm:$0xff]
                  %317 = vst [vmem:[%s287 + $0x70] sm:$0xff] %v316
                  %v318 = vld [vmem:[%s286 + $0x78] sm:$0xff]
                  %319 = vst [vmem:[%s287 + $0x78] sm:$0xff] %v318
                  %v320 = vld [vmem:[%s286 + $0x200] sm:$0xff]
                  %321 = vst [vmem:[%s287 + $0x80] sm:$0xff] %v320
                  %v322 = vld [vmem:[%s286 + $0x208] sm:$0xff]
                  %323 = vst [vmem:[%s287 + $0x88] sm:$0xff] %v322
                  %v324 = vld [vmem:[%s286 + $0x210] sm:$0xff]
                  %325 = vst [vmem:[%s287 + $0x90] sm:$0xff] %v324
                  %v326 = vld [vmem:[%s286 + $0x218] sm:$0xff]
                  %327 = vst [vmem:[%s287 + $0x98] sm:$0xff] %v326
                  %v328 = vld [vmem:[%s286 + $0x220] sm:$0xff]
                  %329 = vst [vmem:[%s287 + $0xa0] sm:$0xff] %v328
                  %v330 = vld [vmem:[%s286 + $0x228] sm:$0xff]
                  %331 = vst [vmem:[%s287 + $0xa8] sm:$0xff] %v330
                  %v332 = vld [vmem:[%s286 + $0x230] sm:$0xff]
                  %333 = vst [vmem:[%s287 + $0xb0] sm:$0xff] %v332
                  %v334 = vld [vmem:[%s286 + $0x238] sm:$0xff]
                  %335 = vst [vmem:[%s287 + $0xb8] sm:$0xff] %v334
                  %v336 = vld [vmem:[%s286 + $0x240] sm:$0xff]
                  %337 = vst [vmem:[%s287 + $0xc0] sm:$0xff] %v336
                  %v338 = vld [vmem:[%s286 + $0x248] sm:$0xff]
                  %339 = vst [vmem:[%s287 + $0xc8] sm:$0xff] %v338
                  %v340 = vld [vmem:[%s286 + $0x250] sm:$0xff]
                  %341 = vst [vmem:[%s287 + $0xd0] sm:$0xff] %v340
                  %v342 = vld [vmem:[%s286 + $0x258] sm:$0xff]
                  %343 = vst [vmem:[%s287 + $0xd8] sm:$0xff] %v342
                  %v344 = vld [vmem:[%s286 + $0x260] sm:$0xff]
                  %345 = vst [vmem:[%s287 + $0xe0] sm:$0xff] %v344
                  %v346 = vld [vmem:[%s286 + $0x268] sm:$0xff]
                  %347 = vst [vmem:[%s287 + $0xe8] sm:$0xff] %v346
                  %v348 = vld [vmem:[%s286 + $0x270] sm:$0xff]
                  %349 = vst [vmem:[%s287 + $0xf0] sm:$0xff] %v348
                  %v350 = vld [vmem:[%s286 + $0x278] sm:$0xff]
                  %351 = vst [vmem:[%s287 + $0xf8] sm:$0xff] %v350
                $region64: #{sdenet_forward.1} parent=58 // loop_footer
                  %s285 = sadd.s32 1, %s281
                $region65: #{sdenet_forward.1} parent=58 // loop_footer_branch
                  %280 = sbr.rel target = $region61
                $region66: #{sdenet_forward.1} parent=58 // loop_exit
                  _
              $region59: #{sdenet_forward.1} parent=43 // pred_fallthru
                _
              // Predicated region
              $region67: #{sdenet_forward.1} parent=43 // pred_check
                _
              $region68: #{sdenet_forward.1} parent=43 // pred_check_branch
                %353 = sbr.rel target = $region70
              $region69: #{sdenet_forward.1} parent=43 // pred_region
                _
              $region70: #{sdenet_forward.1} parent=43 // pred_fallthru
                _
            $region44: #{sdenet_forward.1} parent=39 // pred_fallthru
              _
            // Predicated region
            $region45: #{sdenet_forward.1} parent=39 // pred_check
              _
            $region46: #{sdenet_forward.1} parent=39 // pred_check_branch
              %204 = sbr.rel target = $region48
            $region47: #{sdenet_forward.1} parent=39 // pred_region
              loop: start=0, step=1, limit=1
              $region49: #{sdenet_forward.1} parent=47 // loop_pre_header
                _
              $region50: #{sdenet_forward.1} parent=47 // loop_header
                %s207 = sphi 0, %s211
                %p208 = scmp.ge.s32.totalorder %s207, 1
                %s212 = sphi %s198, %s198
                %s213 = sphi %s195, %s195
              $region51: #{sdenet_forward.1} parent=47 // loop_header_branch
                %210 = sbr.rel (%p208) target = $region55
              $region52: #{sdenet_forward.1} parent=47 // loop_body
                %v214 = vld [vmem:[%s212] sm:$0xff]
                %215 = vst [vmem:[%s213] sm:$0xff] %v214
                %v216 = vld [vmem:[%s212 + $0x8] sm:$0xff]
                %217 = vst [vmem:[%s213 + $0x8] sm:$0xff] %v216
                %v218 = vld [vmem:[%s212 + $0x10] sm:$0xff]
                %219 = vst [vmem:[%s213 + $0x10] sm:$0xff] %v218
                %v220 = vld [vmem:[%s212 + $0x18] sm:$0xff]
                %221 = vst [vmem:[%s213 + $0x18] sm:$0xff] %v220
                %v222 = vld [vmem:[%s212 + $0x20] sm:$0xff]
                %223 = vst [vmem:[%s213 + $0x20] sm:$0xff] %v222
                %v224 = vld [vmem:[%s212 + $0x28] sm:$0xff]
                %225 = vst [vmem:[%s213 + $0x28] sm:$0xff] %v224
                %v226 = vld [vmem:[%s212 + $0x30] sm:$0xff]
                %227 = vst [vmem:[%s213 + $0x30] sm:$0xff] %v226
                %v228 = vld [vmem:[%s212 + $0x38] sm:$0xff]
                %229 = vst [vmem:[%s213 + $0x38] sm:$0xff] %v228
                %v230 = vld [vmem:[%s212 + $0x40] sm:$0xff]
                %231 = vst [vmem:[%s213 + $0x40] sm:$0xff] %v230
                %v232 = vld [vmem:[%s212 + $0x48] sm:$0xff]
                %233 = vst [vmem:[%s213 + $0x48] sm:$0xff] %v232
                %v234 = vld [vmem:[%s212 + $0x50] sm:$0xff]
                %235 = vst [vmem:[%s213 + $0x50] sm:$0xff] %v234
                %v236 = vld [vmem:[%s212 + $0x58] sm:$0xff]
                %237 = vst [vmem:[%s213 + $0x58] sm:$0xff] %v236
                %v238 = vld [vmem:[%s212 + $0x60] sm:$0xff]
                %239 = vst [vmem:[%s213 + $0x60] sm:$0xff] %v238
                %v240 = vld [vmem:[%s212 + $0x68] sm:$0xff]
                %241 = vst [vmem:[%s213 + $0x68] sm:$0xff] %v240
                %v242 = vld [vmem:[%s212 + $0x70] sm:$0xff]
                %243 = vst [vmem:[%s213 + $0x70] sm:$0xff] %v242
                %v244 = vld [vmem:[%s212 + $0x78] sm:$0xff]
                %245 = vst [vmem:[%s213 + $0x78] sm:$0xff] %v244
                %v246 = vld [vmem:[%s212 + $0x200] sm:$0xff]
                %247 = vst [vmem:[%s213 + $0x80] sm:$0xff] %v246
                %v248 = vld [vmem:[%s212 + $0x208] sm:$0xff]
                %249 = vst [vmem:[%s213 + $0x88] sm:$0xff] %v248
                %v250 = vld [vmem:[%s212 + $0x210] sm:$0xff]
                %251 = vst [vmem:[%s213 + $0x90] sm:$0xff] %v250
                %v252 = vld [vmem:[%s212 + $0x218] sm:$0xff]
                %253 = vst [vmem:[%s213 + $0x98] sm:$0xff] %v252
                %v254 = vld [vmem:[%s212 + $0x220] sm:$0xff]
                %255 = vst [vmem:[%s213 + $0xa0] sm:$0xff] %v254
                %v256 = vld [vmem:[%s212 + $0x228] sm:$0xff]
                %257 = vst [vmem:[%s213 + $0xa8] sm:$0xff] %v256
                %v258 = vld [vmem:[%s212 + $0x230] sm:$0xff]
                %259 = vst [vmem:[%s213 + $0xb0] sm:$0xff] %v258
                %v260 = vld [vmem:[%s212 + $0x238] sm:$0xff]
                %261 = vst [vmem:[%s213 + $0xb8] sm:$0xff] %v260
                %v262 = vld [vmem:[%s212 + $0x240] sm:$0xff]
                %263 = vst [vmem:[%s213 + $0xc0] sm:$0xff] %v262
                %v264 = vld [vmem:[%s212 + $0x248] sm:$0xff]
                %265 = vst [vmem:[%s213 + $0xc8] sm:$0xff] %v264
                %v266 = vld [vmem:[%s212 + $0x250] sm:$0xff]
                %267 = vst [vmem:[%s213 + $0xd0] sm:$0xff] %v266
                %v268 = vld [vmem:[%s212 + $0x258] sm:$0xff]
                %269 = vst [vmem:[%s213 + $0xd8] sm:$0xff] %v268
                %v270 = vld [vmem:[%s212 + $0x260] sm:$0xff]
                %271 = vst [vmem:[%s213 + $0xe0] sm:$0xff] %v270
                %v272 = vld [vmem:[%s212 + $0x268] sm:$0xff]
                %273 = vst [vmem:[%s213 + $0xe8] sm:$0xff] %v272
                %v274 = vld [vmem:[%s212 + $0x270] sm:$0xff]
                %275 = vst [vmem:[%s213 + $0xf0] sm:$0xff] %v274
                %v276 = vld [vmem:[%s212 + $0x278] sm:$0xff]
                %277 = vst [vmem:[%s213 + $0xf8] sm:$0xff] %v276
              $region53: #{sdenet_forward.1} parent=47 // loop_footer
                %s211 = sadd.s32 1, %s207
              $region54: #{sdenet_forward.1} parent=47 // loop_footer_branch
                %206 = sbr.rel target = $region50
              $region55: #{sdenet_forward.1} parent=47 // loop_exit
                _
            $region48: #{sdenet_forward.1} parent=39 // pred_fallthru
              _
          $region40: #{sdenet_forward.1} parent=35 // pred_fallthru
            _
          %354 = vnop
        $region36: #{sdenet_forward.1} parent=27 // pred_fallthru
          _
      $region28: #{sdenet_forward.1} parent=5 // pred_fallthru
        _
      %p355 = scmp.le.s32.totalorder 1, %s11
      %p356 = scmp.lt.s32.totalorder %s11, 5
      %p357 = pnand %p355, %p356
      %p358 = pneg %p357
      // Predicated region
      $region71: #{sdenet_forward.1} parent=5 // pred_check
        _
      $region72: #{sdenet_forward.1} parent=5 // pred_check_branch
        %360 = sbr.rel (%p357) target = $region74
      $region73: #{sdenet_forward.1} parent=5 // pred_region
        %s361 = ssub.s32 %s11, 1
        %s362 = sand.u32 %s113, 1
        %s363 = sand.u32 %s113, 1
        %s364 = smul.addr %s363, 256
        %s365 = scalar_lea.vmem [#allocation2], %s364
        // Predicated region
        $region75: #{sdenet_forward.1} parent=73 // pred_check
          %p366 = pneg %p126
        $region76: #{sdenet_forward.1} parent=73 // pred_check_branch
          %368 = sbr.rel (%p366) target = $region78
        $region77: #{sdenet_forward.1} parent=73 // pred_region
          _
        $region78: #{sdenet_forward.1} parent=73 // pred_fallthru
          _
        %s369 = smul.u32 16, %s16
        %p370 = scmp.lt.s32.totalorder %s369, 63
        %s371 = scalar_select %p370, %s369, 63
        %s372 = smul.addr %s371, 8
        %s373 = scalar_lea.vmem %s0, %s372
        %p374 = pneg %p37
        %p375 = pneg %p34
        %p376 = pneg %p58
        %p377 = pneg %p55
        %p378 = pneg %p79
        %p379 = pneg %p76
        %p380 = pneg %p100
        %p381 = pneg %p97
        %s382 = sand.u32 %s113, 1
        %s383 = sand.u32 %s113, 1
        %s384 = smul.addr %s383, 256
        %s385 = scalar_lea.vmem [#allocation2], %s384
        %p386 = pneg %p126
        %p387 = pneg %p123
        %p388 = pneg %p152
        %p389 = pneg %p149
        %s390 = smul.u32 16, %s16
        %p391 = scmp.lt.s32.totalorder %s390, 63
        %s392 = scalar_select %p391, %s390, 63
        %s393 = smul.addr %s392, 8
        %s394 = scalar_lea.vmem %s5, %s393
        %s395 = smul.u32 16, %s16
        %p396 = scmp.lt.s32.totalorder %s395, 63
        %s397 = scalar_select %p396, %s395, 63
        %s398 = smul.addr %s397, 8
        %s399 = scalar_lea.vmem %s0, %s398
        %s400 = smul.u32 16, %s16
        %s401 = smul.u32 16, %s16
        %s402 = smul.u32 16, %s16
        %p403 = scmp.lt.s32.totalorder %s402, 63
        %s404 = scalar_select %p403, %s402, 63
        %s405 = smul.addr %s404, 8
        %s406 = scalar_lea.vmem %s5, %s405
        %s407 = smul.u32 16, %s16
        %v409 = vld [vmem:[%s399] sm:$0xff]
        %v410 = vld [vmem:[%s399 + $0x8] sm:$0xff]
        %v411 = vld [vmem:[%s399 + $0x10] sm:$0xff]
        %v412 = vld [vmem:[%s399 + $0x18] sm:$0xff]
        %v413 = vld [vmem:[%s399 + $0x20] sm:$0xff]
        %v414 = vld [vmem:[%s399 + $0x28] sm:$0xff]
        %v415 = vld [vmem:[%s399 + $0x30] sm:$0xff]
        %v416 = vld [vmem:[%s399 + $0x38] sm:$0xff]
        %v417 = vld [vmem:[%s399 + $0x40] sm:$0xff]
        %v418 = vld [vmem:[%s399 + $0x48] sm:$0xff]
        %v419 = vld [vmem:[%s399 + $0x50] sm:$0xff]
        %v420 = vld [vmem:[%s399 + $0x58] sm:$0xff]
        %v421 = vld [vmem:[%s399 + $0x60] sm:$0xff]
        %v422 = vld [vmem:[%s399 + $0x68] sm:$0xff]
        %v423 = vld [vmem:[%s399 + $0x70] sm:$0xff]
        %v424 = vld [vmem:[%s399 + $0x78] sm:$0xff]
        %v425 = vld [vmem:[%s1] sm:$0xf]
        %v426 = vld [vmem:[%s3] sm:$0xff]
        %v427 = vlaneseq
        %v428 = vshrl.u32 %v427, 7
        %v429 = vsub.s32 0, %v428
        %v430 = vrot.slane %v426, %v429
        %432 = vset.pattern.permute.xlu0 0
        %433 = vperm.xlu0 %432, %v409
        %v434 = vpop.permute.xlu0 %433
        %437 = vset.pattern.permute.xlu0 0
        %438 = vperm.xlu0 %437, %v410
        %v439 = vpop.permute.xlu0 %438
        %442 = vset.pattern.permute.xlu0 0
        %443 = vperm.xlu0 %442, %v411
        %v444 = vpop.permute.xlu0 %443
        %447 = vset.pattern.permute.xlu0 0
        %448 = vperm.xlu0 %447, %v412
        %v449 = vpop.permute.xlu0 %448
        %452 = vset.pattern.permute.xlu0 0
        %453 = vperm.xlu0 %452, %v413
        %v454 = vpop.permute.xlu0 %453
        %457 = vset.pattern.permute.xlu0 0
        %458 = vperm.xlu0 %457, %v414
        %v459 = vpop.permute.xlu0 %458
        %462 = vset.pattern.permute.xlu0 0
        %463 = vperm.xlu0 %462, %v415
        %v464 = vpop.permute.xlu0 %463
        %467 = vset.pattern.permute.xlu0 0
        %468 = vperm.xlu0 %467, %v416
        %v469 = vpop.permute.xlu0 %468
        %472 = vset.pattern.permute.xlu0 0
        %473 = vperm.xlu0 %472, %v417
        %v474 = vpop.permute.xlu0 %473
        %477 = vset.pattern.permute.xlu0 0
        %478 = vperm.xlu0 %477, %v418
        %v479 = vpop.permute.xlu0 %478
        %482 = vset.pattern.permute.xlu0 0
        %483 = vperm.xlu0 %482, %v419
        %v484 = vpop.permute.xlu0 %483
        %487 = vset.pattern.permute.xlu0 0
        %488 = vperm.xlu0 %487, %v420
        %v489 = vpop.permute.xlu0 %488
        %492 = vset.pattern.permute.xlu0 0
        %493 = vperm.xlu0 %492, %v421
        %v494 = vpop.permute.xlu0 %493
        %497 = vset.pattern.permute.xlu0 0
        %498 = vperm.xlu0 %497, %v422
        %v499 = vpop.permute.xlu0 %498
        %502 = vset.pattern.permute.xlu0 0
        %503 = vperm.xlu0 %502, %v423
        %v504 = vpop.permute.xlu0 %503
        %507 = vset.pattern.permute.xlu0 0
        %508 = vperm.xlu0 %507, %v424
        %v509 = vpop.permute.xlu0 %508
        %v511 = vlaneseq
        %v512 = vshrl.u32 %v511, 7
        %v513 = vsub.s32 0, %v512
        %v514 = vrot.slane %v425, %v513
        %v515 = vmul.f32 %v434, %v514
        %v516 = vmul.f32 %v439, %v514
        %v517 = vmul.f32 %v444, %v514
        %v518 = vmul.f32 %v449, %v514
        %v519 = vmul.f32 %v454, %v514
        %v520 = vmul.f32 %v459, %v514
        %v521 = vmul.f32 %v464, %v514
        %v522 = vmul.f32 %v469, %v514
        %v523 = vmul.f32 %v474, %v514
        %v524 = vmul.f32 %v479, %v514
        %v525 = vmul.f32 %v484, %v514
        %v526 = vmul.f32 %v489, %v514
        %v527 = vmul.f32 %v494, %v514
        %v528 = vmul.f32 %v499, %v514
        %v529 = vmul.f32 %v504, %v514
        %v530 = vmul.f32 %v509, %v514
        %v531 = vadd.f32 %v430, %v515
        %v532 = vadd.f32 %v430, %v516
        %v533 = vadd.f32 %v430, %v517
        %v534 = vadd.f32 %v430, %v518
        %v535 = vadd.f32 %v430, %v519
        %v536 = vadd.f32 %v430, %v520
        %v537 = vadd.f32 %v430, %v521
        %v538 = vadd.f32 %v430, %v522
        %v539 = vadd.f32 %v430, %v523
        %v540 = vadd.f32 %v430, %v524
        %v541 = vadd.f32 %v430, %v525
        %v542 = vadd.f32 %v430, %v526
        %v543 = vadd.f32 %v430, %v527
        %v544 = vadd.f32 %v430, %v528
        %v545 = vadd.f32 %v430, %v529
        %v546 = vadd.f32 %v430, %v530
        %547 = vset.pattern.permute.xlu0 1
        %548 = vperm.xlu0 %547, %v409
        %v549 = vpop.permute.xlu0 %548
        %551 = vset.pattern.permute.xlu0 1
        %552 = vperm.xlu0 %551, %v410
        %v553 = vpop.permute.xlu0 %552
        %555 = vset.pattern.permute.xlu0 1
        %556 = vperm.xlu0 %555, %v411
        %v557 = vpop.permute.xlu0 %556
        %559 = vset.pattern.permute.xlu0 1
        %560 = vperm.xlu0 %559, %v412
        %v561 = vpop.permute.xlu0 %560
        %563 = vset.pattern.permute.xlu0 1
        %564 = vperm.xlu0 %563, %v413
        %v565 = vpop.permute.xlu0 %564
        %567 = vset.pattern.permute.xlu0 1
        %568 = vperm.xlu0 %567, %v414
        %v569 = vpop.permute.xlu0 %568
        %571 = vset.pattern.permute.xlu0 1
        %572 = vperm.xlu0 %571, %v415
        %v573 = vpop.permute.xlu0 %572
        %575 = vset.pattern.permute.xlu0 1
        %576 = vperm.xlu0 %575, %v416
        %v577 = vpop.permute.xlu0 %576
        %579 = vset.pattern.permute.xlu0 1
        %580 = vperm.xlu0 %579, %v417
        %v581 = vpop.permute.xlu0 %580
        %583 = vset.pattern.permute.xlu0 1
        %584 = vperm.xlu0 %583, %v418
        %v585 = vpop.permute.xlu0 %584
        %587 = vset.pattern.permute.xlu0 1
        %588 = vperm.xlu0 %587, %v419
        %v589 = vpop.permute.xlu0 %588
        %591 = vset.pattern.permute.xlu0 1
        %592 = vperm.xlu0 %591, %v420
        %v593 = vpop.permute.xlu0 %592
        %595 = vset.pattern.permute.xlu0 1
        %596 = vperm.xlu0 %595, %v421
        %v597 = vpop.permute.xlu0 %596
        %599 = vset.pattern.permute.xlu0 1
        %600 = vperm.xlu0 %599, %v422
        %v601 = vpop.permute.xlu0 %600
        %603 = vset.pattern.permute.xlu0 1
        %604 = vperm.xlu0 %603, %v423
        %v605 = vpop.permute.xlu0 %604
        %607 = vset.pattern.permute.xlu0 1
        %608 = vperm.xlu0 %607, %v424
        %v609 = vpop.permute.xlu0 %608
        %v611 = vlaneseq
        %v612 = vshrl.u32 %v611, 7
        %v613 = vsub.s32 1, %v612
        %v614 = vrot.slane %v425, %v613
        %v615 = vmul.f32 %v549, %v614
        %v616 = vmul.f32 %v553, %v614
        %v617 = vmul.f32 %v557, %v614
        %v618 = vmul.f32 %v561, %v614
        %v619 = vmul.f32 %v565, %v614
        %v620 = vmul.f32 %v569, %v614
        %v621 = vmul.f32 %v573, %v614
        %v622 = vmul.f32 %v577, %v614
        %v623 = vmul.f32 %v581, %v614
        %v624 = vmul.f32 %v585, %v614
        %v625 = vmul.f32 %v589, %v614
        %v626 = vmul.f32 %v593, %v614
        %v627 = vmul.f32 %v597, %v614
        %v628 = vmul.f32 %v601, %v614
        %v629 = vmul.f32 %v605, %v614
        %v630 = vmul.f32 %v609, %v614
        %v631 = vadd.f32 %v531, %v615
        %v632 = vadd.f32 %v532, %v616
        %v633 = vadd.f32 %v533, %v617
        %v634 = vadd.f32 %v534, %v618
        %v635 = vadd.f32 %v535, %v619
        %v636 = vadd.f32 %v536, %v620
        %v637 = vadd.f32 %v537, %v621
        %v638 = vadd.f32 %v538, %v622
        %v639 = vadd.f32 %v539, %v623
        %v640 = vadd.f32 %v540, %v624
        %v641 = vadd.f32 %v541, %v625
        %v642 = vadd.f32 %v542, %v626
        %v643 = vadd.f32 %v543, %v627
        %v644 = vadd.f32 %v544, %v628
        %v645 = vadd.f32 %v545, %v629
        %v646 = vadd.f32 %v546, %v630
        %647 = vset.pattern.permute.xlu0 2
        %648 = vperm.xlu0 %647, %v409
        %v649 = vpop.permute.xlu0 %648
        %651 = vset.pattern.permute.xlu0 2
        %652 = vperm.xlu0 %651, %v410
        %v653 = vpop.permute.xlu0 %652
        %655 = vset.pattern.permute.xlu0 2
        %656 = vperm.xlu0 %655, %v411
        %v657 = vpop.permute.xlu0 %656
        %659 = vset.pattern.permute.xlu0 2
        %660 = vperm.xlu0 %659, %v412
        %v661 = vpop.permute.xlu0 %660
        %663 = vset.pattern.permute.xlu0 2
        %664 = vperm.xlu0 %663, %v413
        %v665 = vpop.permute.xlu0 %664
        %667 = vset.pattern.permute.xlu0 2
        %668 = vperm.xlu0 %667, %v414
        %v669 = vpop.permute.xlu0 %668
        %671 = vset.pattern.permute.xlu0 2
        %672 = vperm.xlu0 %671, %v415
        %v673 = vpop.permute.xlu0 %672
        %675 = vset.pattern.permute.xlu0 2
        %676 = vperm.xlu0 %675, %v416
        %v677 = vpop.permute.xlu0 %676
        %679 = vset.pattern.permute.xlu0 2
        %680 = vperm.xlu0 %679, %v417
        %v681 = vpop.permute.xlu0 %680
        %683 = vset.pattern.permute.xlu0 2
        %684 = vperm.xlu0 %683, %v418
        %v685 = vpop.permute.xlu0 %684
        %687 = vset.pattern.permute.xlu0 2
        %688 = vperm.xlu0 %687, %v419
        %v689 = vpop.permute.xlu0 %688
        %691 = vset.pattern.permute.xlu0 2
        %692 = vperm.xlu0 %691, %v420
        %v693 = vpop.permute.xlu0 %692
        %695 = vset.pattern.permute.xlu0 2
        %696 = vperm.xlu0 %695, %v421
        %v697 = vpop.permute.xlu0 %696
        %699 = vset.pattern.permute.xlu0 2
        %700 = vperm.xlu0 %699, %v422
        %v701 = vpop.permute.xlu0 %700
        %703 = vset.pattern.permute.xlu0 2
        %704 = vperm.xlu0 %703, %v423
        %v705 = vpop.permute.xlu0 %704
        %707 = vset.pattern.permute.xlu0 2
        %708 = vperm.xlu0 %707, %v424
        %v709 = vpop.permute.xlu0 %708
        %v711 = vlaneseq
        %v712 = vshrl.u32 %v711, 7
        %v713 = vsub.s32 2, %v712
        %v714 = vrot.slane %v425, %v713
        %v715 = vmul.f32 %v649, %v714
        %v716 = vmul.f32 %v653, %v714
        %v717 = vmul.f32 %v657, %v714
        %v718 = vmul.f32 %v661, %v714
        %v719 = vmul.f32 %v665, %v714
        %v720 = vmul.f32 %v669, %v714
        %v721 = vmul.f32 %v673, %v714
        %v722 = vmul.f32 %v677, %v714
        %v723 = vmul.f32 %v681, %v714
        %v724 = vmul.f32 %v685, %v714
        %v725 = vmul.f32 %v689, %v714
        %v726 = vmul.f32 %v693, %v714
        %v727 = vmul.f32 %v697, %v714
        %v728 = vmul.f32 %v701, %v714
        %v729 = vmul.f32 %v705, %v714
        %v730 = vmul.f32 %v709, %v714
        %v731 = vadd.f32 %v631, %v715
        %v732 = vadd.f32 %v632, %v716
        %v733 = vadd.f32 %v633, %v717
        %v734 = vadd.f32 %v634, %v718
        %v735 = vadd.f32 %v635, %v719
        %v736 = vadd.f32 %v636, %v720
        %v737 = vadd.f32 %v637, %v721
        %v738 = vadd.f32 %v638, %v722
        %v739 = vadd.f32 %v639, %v723
        %v740 = vadd.f32 %v640, %v724
        %v741 = vadd.f32 %v641, %v725
        %v742 = vadd.f32 %v642, %v726
        %v743 = vadd.f32 %v643, %v727
        %v744 = vadd.f32 %v644, %v728
        %v745 = vadd.f32 %v645, %v729
        %v746 = vadd.f32 %v646, %v730
        %747 = vset.pattern.permute.xlu0 3
        %748 = vperm.xlu0 %747, %v409
        %v749 = vpop.permute.xlu0 %748
        %751 = vset.pattern.permute.xlu0 3
        %752 = vperm.xlu0 %751, %v410
        %v753 = vpop.permute.xlu0 %752
        %755 = vset.pattern.permute.xlu0 3
        %756 = vperm.xlu0 %755, %v411
        %v757 = vpop.permute.xlu0 %756
        %759 = vset.pattern.permute.xlu0 3
        %760 = vperm.xlu0 %759, %v412
        %v761 = vpop.permute.xlu0 %760
        %763 = vset.pattern.permute.xlu0 3
        %764 = vperm.xlu0 %763, %v413
        %v765 = vpop.permute.xlu0 %764
        %767 = vset.pattern.permute.xlu0 3
        %768 = vperm.xlu0 %767, %v414
        %v769 = vpop.permute.xlu0 %768
        %771 = vset.pattern.permute.xlu0 3
        %772 = vperm.xlu0 %771, %v415
        %v773 = vpop.permute.xlu0 %772
        %775 = vset.pattern.permute.xlu0 3
        %776 = vperm.xlu0 %775, %v416
        %v777 = vpop.permute.xlu0 %776
        %779 = vset.pattern.permute.xlu0 3
        %780 = vperm.xlu0 %779, %v417
        %v781 = vpop.permute.xlu0 %780
        %783 = vset.pattern.permute.xlu0 3
        %784 = vperm.xlu0 %783, %v418
        %v785 = vpop.permute.xlu0 %784
        %787 = vset.pattern.permute.xlu0 3
        %788 = vperm.xlu0 %787, %v419
        %v789 = vpop.permute.xlu0 %788
        %791 = vset.pattern.permute.xlu0 3
        %792 = vperm.xlu0 %791, %v420
        %v793 = vpop.permute.xlu0 %792
        %795 = vset.pattern.permute.xlu0 3
        %796 = vperm.xlu0 %795, %v421
        %v797 = vpop.permute.xlu0 %796
        %799 = vset.pattern.permute.xlu0 3
        %800 = vperm.xlu0 %799, %v422
        %v801 = vpop.permute.xlu0 %800
        %803 = vset.pattern.permute.xlu0 3
        %804 = vperm.xlu0 %803, %v423
        %v805 = vpop.permute.xlu0 %804
        %807 = vset.pattern.permute.xlu0 3
        %808 = vperm.xlu0 %807, %v424
        %v809 = vpop.permute.xlu0 %808
        %v811 = vlaneseq
        %v812 = vshrl.u32 %v811, 7
        %v813 = vsub.s32 3, %v812
        %v814 = vrot.slane %v425, %v813
        %v815 = vmul.f32 %v749, %v814
        %v816 = vmul.f32 %v753, %v814
        %v817 = vmul.f32 %v757, %v814
        %v818 = vmul.f32 %v761, %v814
        %v819 = vmul.f32 %v765, %v814
        %v820 = vmul.f32 %v769, %v814
        %v821 = vmul.f32 %v773, %v814
        %v822 = vmul.f32 %v777, %v814
        %v823 = vmul.f32 %v781, %v814
        %v824 = vmul.f32 %v785, %v814
        %v825 = vmul.f32 %v789, %v814
        %v826 = vmul.f32 %v793, %v814
        %v827 = vmul.f32 %v797, %v814
        %v828 = vmul.f32 %v801, %v814
        %v829 = vmul.f32 %v805, %v814
        %v830 = vmul.f32 %v809, %v814
        %v831 = vadd.f32 %v731, %v815
        %v832 = vadd.f32 %v732, %v816
        %v833 = vadd.f32 %v733, %v817
        %v834 = vadd.f32 %v734, %v818
        %v835 = vadd.f32 %v735, %v819
        %v836 = vadd.f32 %v736, %v820
        %v837 = vadd.f32 %v737, %v821
        %v838 = vadd.f32 %v738, %v822
        %v839 = vadd.f32 %v739, %v823
        %v840 = vadd.f32 %v740, %v824
        %v841 = vadd.f32 %v741, %v825
        %v842 = vadd.f32 %v742, %v826
        %v843 = vadd.f32 %v743, %v827
        %v844 = vadd.f32 %v744, %v828
        %v845 = vadd.f32 %v745, %v829
        %v846 = vadd.f32 %v746, %v830
        %v847 = vtanh.pop %v831
        %v848 = vtanh.pop %v832
        %v849 = vtanh.pop %v833
        %v850 = vtanh.pop %v834
        %v851 = vtanh.pop %v835
        %v852 = vtanh.pop %v836
        %v853 = vtanh.pop %v837
        %v854 = vtanh.pop %v838
        %v855 = vtanh.pop %v839
        %v856 = vtanh.pop %v840
        %v857 = vtanh.pop %v841
        %v858 = vtanh.pop %v842
        %v859 = vtanh.pop %v843
        %v860 = vtanh.pop %v844
        %v861 = vtanh.pop %v845
        %v862 = vtanh.pop %v846
        %v863 = vld [vmem:[%s365] sm:$0xff]
        %v864 = vld [vmem:[%s365 + $0x8] sm:$0xff]
        %v865 = vld [vmem:[%s365 + $0x10] sm:$0xff]
        %v866 = vld [vmem:[%s365 + $0x18] sm:$0xff]
        %v867 = vld [vmem:[%s365 + $0x20] sm:$0xff]
        %v868 = vld [vmem:[%s365 + $0x28] sm:$0xff]
        %v869 = vld [vmem:[%s365 + $0x30] sm:$0xff]
        %v870 = vld [vmem:[%s365 + $0x38] sm:$0xff]
        %v871 = vld [vmem:[%s365 + $0x40] sm:$0xff]
        %v872 = vld [vmem:[%s365 + $0x48] sm:$0xff]
        %v873 = vld [vmem:[%s365 + $0x50] sm:$0xff]
        %v874 = vld [vmem:[%s365 + $0x58] sm:$0xff]
        %v875 = vld [vmem:[%s365 + $0x60] sm:$0xff]
        %v876 = vld [vmem:[%s365 + $0x68] sm:$0xff]
        %v877 = vld [vmem:[%s365 + $0x70] sm:$0xff]
        %v878 = vld [vmem:[%s365 + $0x78] sm:$0xff]
        %v879 = vpack.c.bf16 %v848, %v847
        %v880 = vpack.c.bf16 %v850, %v849
        %v881 = vpack.c.bf16 %v852, %v851
        %v882 = vpack.c.bf16 %v854, %v853
        %v883 = vpack.c.bf16 %v856, %v855
        %v884 = vpack.c.bf16 %v858, %v857
        %v885 = vpack.c.bf16 %v860, %v859
        %v886 = vpack.c.bf16 %v862, %v861
        %v887 = vld [vmem:[%s2] sm:$0xf]
        %v888 = vld [vmem:[%s2 + $0x4] sm:$0xf]
        %v889 = vld [vmem:[%s2 + $0x8] sm:$0xf]
        %v890 = vld [vmem:[%s2 + $0xc] sm:$0xf]
        %v891 = vlaneseq
        %v892 = vshrl.u32 %v891, 7
        %v893 = vsub.s32 1, %v892
        %v894 = vrot.slane %v426, %v893
        %v899 = vunpack.c.l.b16 %v887
        %v900 = vunpack.c.l.b16 %v888
        %v901 = vunpack.c.l.b16 %v889
        %v902 = vunpack.c.l.b16 %v890
        %v903 = vpack.c.b16 %v900, %v899
        %v904 = vpack.c.b16 %v902, %v901
        %vm907 = vcmask 261120
        %v909 = vsel %vm907, %v879, 0
        %v912 = vsel %vm907, %v880, 0
        %v915 = vsel %vm907, %v881, 0
        %v918 = vsel %vm907, %v882, 0
        %v921 = vsel %vm907, %v883, 0
        %v924 = vsel %vm907, %v884, 0
        %v927 = vsel %vm907, %v885, 0
        %v930 = vsel %vm907, %v886, 0
        %932 = vmatprep.subr.bf16.mxu0 0
        %933 = vmatpush1.bf16.msra.mxu0 %v903
        %934 = vmatprep.subr.bf16.mxu0 0
        %935 = vmatpush1.bf16.msra.mxu0 %v904
        %936 = vmatprep.subr.bf16.mxu0 0
        %937 = vmatpush1.bf16.msra.mxu0 0
        %938 = vmatprep.subr.bf16.mxu0 0
        %939 = vmatpush1.bf16.msra.mxu0 0
        %940 = vmatprep.subr.bf16.mxu0 0
        %941 = vmatpush1.bf16.msra.mxu0 0
        %942 = vmatprep.subr.bf16.mxu0 0
        %943 = vmatpush1.bf16.msra.mxu0 0
        %944 = vmatprep.subr.bf16.mxu0 0
        %945 = vmatpush1.bf16.msra.mxu0 0
        %946 = vmatprep.subr.bf16.mxu0 0
        %947 = vmatpush1.bf16.msra.mxu0 0
        %948 = vmatprep.subr.bf16.mxu0 0
        %949 = vmatpush1.bf16.msra.mxu0 0
        %950 = vmatprep.subr.bf16.mxu0 0
        %951 = vmatpush1.bf16.msra.mxu0 0
        %952 = vmatprep.subr.bf16.mxu0 0
        %953 = vmatpush1.bf16.msra.mxu0 0
        %954 = vmatprep.subr.bf16.mxu0 0
        %955 = vmatpush1.bf16.msra.mxu0 0
        %956 = vmatprep.subr.bf16.mxu0 0
        %957 = vmatpush1.bf16.msra.mxu0 0
        %958 = vmatprep.subr.bf16.mxu0 0
        %959 = vmatpush1.bf16.msra.mxu0 0
        %960 = vmatprep.subr.bf16.mxu0 0
        %961 = vmatpush1.bf16.msra.mxu0 0
        %962 = vmatprep.subr.bf16.mxu0 0
        %963 = vmatpush1.bf16.msra.mxu0 0
        %964 = vmatprep.mubr.bf16.mxu0 0
        %965 = vmatmul.mubr.bf16.gmra.mrb[0].mxu0 %v909
        %v966 = vpop.f32.mrb[0].mxu0
        %v967 = vadd.f32 %v894, %v966
        %v968 = vpop.f32.mrb[0].mxu0
        %v969 = vpop.f32.mrb[0].mxu0
        %v970 = vadd.f32 %v894, %v969
        %v971 = vpop.f32.mrb[0].mxu0
        %972 = vmatprep.mubr.bf16.mxu0 0
        %973 = vmatmul.mubr.bf16.gmra.mrb[0].mxu0 %v912
        %v974 = vpop.f32.mrb[0].mxu0
        %v975 = vadd.f32 %v894, %v974
        %v976 = vpop.f32.mrb[0].mxu0
        %v977 = vpop.f32.mrb[0].mxu0
        %v978 = vadd.f32 %v894, %v977
        %v979 = vpop.f32.mrb[0].mxu0
        %980 = vmatprep.mubr.bf16.mxu0 0
        %981 = vmatmul.mubr.bf16.gmra.mrb[0].mxu0 %v915
        %v982 = vpop.f32.mrb[0].mxu0
        %v983 = vadd.f32 %v894, %v982
        %v984 = vpop.f32.mrb[0].mxu0
        %v985 = vpop.f32.mrb[0].mxu0
        %v986 = vadd.f32 %v894, %v985
        %v987 = vpop.f32.mrb[0].mxu0
        %988 = vmatprep.mubr.bf16.mxu0 0
        %989 = vmatmul.mubr.bf16.gmra.mrb[0].mxu0 %v918
        %v990 = vpop.f32.mrb[0].mxu0
        %v991 = vadd.f32 %v894, %v990
        %v992 = vpop.f32.mrb[0].mxu0
        %v993 = vpop.f32.mrb[0].mxu0
        %v994 = vadd.f32 %v894, %v993
        %v995 = vpop.f32.mrb[0].mxu0
        %996 = vmatprep.mubr.bf16.mxu0 0
        %997 = vmatmul.mubr.bf16.gmra.mrb[0].mxu0 %v921
        %v998 = vpop.f32.mrb[0].mxu0
        %v999 = vadd.f32 %v894, %v998
        %v1000 = vpop.f32.mrb[0].mxu0
        %v1001 = vpop.f32.mrb[0].mxu0
        %v1002 = vadd.f32 %v894, %v1001
        %v1003 = vpop.f32.mrb[0].mxu0
        %1004 = vmatprep.mubr.bf16.mxu0 0
        %1005 = vmatmul.mubr.bf16.gmra.mrb[0].mxu0 %v924
        %v1006 = vpop.f32.mrb[0].mxu0
        %v1007 = vadd.f32 %v894, %v1006
        %v1008 = vpop.f32.mrb[0].mxu0
        %v1009 = vpop.f32.mrb[0].mxu0
        %v1010 = vadd.f32 %v894, %v1009
        %v1011 = vpop.f32.mrb[0].mxu0
        %1012 = vmatprep.mubr.bf16.mxu0 0
        %1013 = vmatmul.mubr.bf16.gmra.mrb[0].mxu0 %v927
        %v1014 = vpop.f32.mrb[0].mxu0
        %v1015 = vadd.f32 %v894, %v1014
        %v1016 = vpop.f32.mrb[0].mxu0
        %v1017 = vpop.f32.mrb[0].mxu0
        %v1018 = vadd.f32 %v894, %v1017
        %v1019 = vpop.f32.mrb[0].mxu0
        %1020 = vmatprep.mubr.bf16.mxu0 0
        %1021 = vmatmul.mubr.bf16.gmra.mrb[0].mxu0 %v930
        %v1022 = vpop.f32.mrb[0].mxu0
        %v1023 = vadd.f32 %v894, %v1022
        %v1024 = vpop.f32.mrb[0].mxu0
        %v1025 = vpop.f32.mrb[0].mxu0
        %v1026 = vadd.f32 %v894, %v1025
        %v1027 = vpop.f32.mrb[0].mxu0
        %1028 = vdwg.mxu0
        %v1029 = vlaneseq
        %v1030 = vshrl.u32 %v1029, 7
        %v1031 = vsub.s32 4, %v1030
        %v1032 = vrot.slane %v426, %v1031
        %v1033 = vmul.f32 %v863, %v1032
        %v1034 = vmul.f32 %v864, %v1032
        %v1035 = vmul.f32 %v865, %v1032
        %v1036 = vmul.f32 %v866, %v1032
        %v1037 = vmul.f32 %v867, %v1032
        %v1038 = vmul.f32 %v868, %v1032
        %v1039 = vmul.f32 %v869, %v1032
        %v1040 = vmul.f32 %v870, %v1032
        %v1041 = vmul.f32 %v871, %v1032
        %v1042 = vmul.f32 %v872, %v1032
        %v1043 = vmul.f32 %v873, %v1032
        %v1044 = vmul.f32 %v874, %v1032
        %v1045 = vmul.f32 %v875, %v1032
        %v1046 = vmul.f32 %v876, %v1032
        %v1047 = vmul.f32 %v877, %v1032
        %v1048 = vmul.f32 %v878, %v1032
        %v1049 = vsel %vm907, %v1033, 0.0
        %1050 = vadd.xlane.f32.xlu0 %v1049
        %v1051 = vpop.xlane.xlu0 %1050
        %v1052 = vsel %vm907, %v1034, 0.0
        %1053 = vadd.xlane.f32.xlu0 %v1052
        %v1054 = vpop.xlane.xlu0 %1053
        %v1055 = vsel %vm907, %v1035, 0.0
        %1056 = vadd.xlane.f32.xlu0 %v1055
        %v1057 = vpop.xlane.xlu0 %1056
        %v1058 = vsel %vm907, %v1036, 0.0
        %1059 = vadd.xlane.f32.xlu0 %v1058
        %v1060 = vpop.xlane.xlu0 %1059
        %v1061 = vsel %vm907, %v1037, 0.0
        %1062 = vadd.xlane.f32.xlu0 %v1061
        %v1063 = vpop.xlane.xlu0 %1062
        %v1064 = vsel %vm907, %v1038, 0.0
        %1065 = vadd.xlane.f32.xlu0 %v1064
        %v1066 = vpop.xlane.xlu0 %1065
        %v1067 = vsel %vm907, %v1039, 0.0
        %1068 = vadd.xlane.f32.xlu0 %v1067
        %v1069 = vpop.xlane.xlu0 %1068
        %v1070 = vsel %vm907, %v1040, 0.0
        %1071 = vadd.xlane.f32.xlu0 %v1070
        %v1072 = vpop.xlane.xlu0 %1071
        %v1073 = vsel %vm907, %v1041, 0.0
        %1074 = vadd.xlane.f32.xlu0 %v1073
        %v1075 = vpop.xlane.xlu0 %1074
        %v1076 = vsel %vm907, %v1042, 0.0
        %1077 = vadd.xlane.f32.xlu0 %v1076
        %v1078 = vpop.xlane.xlu0 %1077
        %v1079 = vsel %vm907, %v1043, 0.0
        %1080 = vadd.xlane.f32.xlu0 %v1079
        %v1081 = vpop.xlane.xlu0 %1080
        %v1082 = vsel %vm907, %v1044, 0.0
        %1083 = vadd.xlane.f32.xlu0 %v1082
        %v1084 = vpop.xlane.xlu0 %1083
        %v1085 = vsel %vm907, %v1045, 0.0
        %1086 = vadd.xlane.f32.xlu0 %v1085
        %v1087 = vpop.xlane.xlu0 %1086
        %v1088 = vsel %vm907, %v1046, 0.0
        %1089 = vadd.xlane.f32.xlu0 %v1088
        %v1090 = vpop.xlane.xlu0 %1089
        %v1091 = vsel %vm907, %v1047, 0.0
        %1092 = vadd.xlane.f32.xlu0 %v1091
        %v1093 = vpop.xlane.xlu0 %1092
        %v1094 = vsel %vm907, %v1048, 0.0
        %1095 = vadd.xlane.f32.xlu0 %v1094
        %v1096 = vpop.xlane.xlu0 %1095
        %v1097 = vmul.f32 %v1051, %v1032
        %v1098 = vmul.f32 %v1054, %v1032
        %v1099 = vmul.f32 %v1057, %v1032
        %v1100 = vmul.f32 %v1060, %v1032
        %v1101 = vmul.f32 %v1063, %v1032
        %v1102 = vmul.f32 %v1066, %v1032
        %v1103 = vmul.f32 %v1069, %v1032
        %v1104 = vmul.f32 %v1072, %v1032
        %v1105 = vmul.f32 %v1075, %v1032
        %v1106 = vmul.f32 %v1078, %v1032
        %v1107 = vmul.f32 %v1081, %v1032
        %v1108 = vmul.f32 %v1084, %v1032
        %v1109 = vmul.f32 %v1087, %v1032
        %v1110 = vmul.f32 %v1090, %v1032
        %v1111 = vmul.f32 %v1093, %v1032
        %v1112 = vmul.f32 %v1096, %v1032
        %v1113 = vmul.f32 %v863, 0.0001
        %v1114 = vmul.f32 %v864, 0.0001
        %v1115 = vmul.f32 %v865, 0.0001
        %v1116 = vmul.f32 %v866, 0.0001
        %v1117 = vmul.f32 %v867, 0.0001
        %v1118 = vmul.f32 %v868, 0.0001
        %v1119 = vmul.f32 %v869, 0.0001
        %v1120 = vmul.f32 %v870, 0.0001
        %v1121 = vmul.f32 %v871, 0.0001
        %v1122 = vmul.f32 %v872, 0.0001
        %v1123 = vmul.f32 %v873, 0.0001
        %v1124 = vmul.f32 %v874, 0.0001
        %v1125 = vmul.f32 %v875, 0.0001
        %v1126 = vmul.f32 %v876, 0.0001
        %v1127 = vmul.f32 %v877, 0.0001
        %v1128 = vmul.f32 %v878, 0.0001
        %v1129 = vadd.f32 %v1097, %v1113
        %v1130 = vadd.f32 %v1098, %v1114
        %v1131 = vadd.f32 %v1099, %v1115
        %v1132 = vadd.f32 %v1100, %v1116
        %v1133 = vadd.f32 %v1101, %v1117
        %v1134 = vadd.f32 %v1102, %v1118
        %v1135 = vadd.f32 %v1103, %v1119
        %v1136 = vadd.f32 %v1104, %v1120
        %v1137 = vadd.f32 %v1105, %v1121
        %v1138 = vadd.f32 %v1106, %v1122
        %v1139 = vadd.f32 %v1107, %v1123
        %v1140 = vadd.f32 %v1108, %v1124
        %v1141 = vadd.f32 %v1109, %v1125
        %v1142 = vadd.f32 %v1110, %v1126
        %v1143 = vadd.f32 %v1111, %v1127
        %v1144 = vadd.f32 %v1112, %v1128
        %v1145 = vtanh.pop %v967
        %v1146 = vtanh.pop %v970
        %v1147 = vtanh.pop %v975
        %v1148 = vtanh.pop %v978
        %v1149 = vtanh.pop %v983
        %v1150 = vtanh.pop %v986
        %v1151 = vtanh.pop %v991
        %v1152 = vtanh.pop %v994
        %v1153 = vtanh.pop %v999
        %v1154 = vtanh.pop %v1002
        %v1155 = vtanh.pop %v1007
        %v1156 = vtanh.pop %v1010
        %v1157 = vtanh.pop %v1015
        %v1158 = vtanh.pop %v1018
        %v1159 = vtanh.pop %v1023
        %v1160 = vtanh.pop %v1026
        %v1161 = vmul.f32 %v1145, 0.1
        %v1162 = vmul.f32 %v1146, 0.1
        %v1163 = vmul.f32 %v1147, 0.1
        %v1164 = vmul.f32 %v1148, 0.1
        %v1165 = vmul.f32 %v1149, 0.1
        %v1166 = vmul.f32 %v1150, 0.1
        %v1167 = vmul.f32 %v1151, 0.1
        %v1168 = vmul.f32 %v1152, 0.1
        %v1169 = vmul.f32 %v1153, 0.1
        %v1170 = vmul.f32 %v1154, 0.1
        %v1171 = vmul.f32 %v1155, 0.1
        %v1172 = vmul.f32 %v1156, 0.1
        %v1173 = vmul.f32 %v1157, 0.1
        %v1174 = vmul.f32 %v1158, 0.1
        %v1175 = vmul.f32 %v1159, 0.1
        %v1176 = vmul.f32 %v1160, 0.1
        %v1177 = vadd.f32 %v847, %v1161
        %v1178 = vadd.f32 %v848, %v1162
        %v1179 = vadd.f32 %v849, %v1163
        %v1180 = vadd.f32 %v850, %v1164
        %v1181 = vadd.f32 %v851, %v1165
        %v1182 = vadd.f32 %v852, %v1166
        %v1183 = vadd.f32 %v853, %v1167
        %v1184 = vadd.f32 %v854, %v1168
        %v1185 = vadd.f32 %v855, %v1169
        %v1186 = vadd.f32 %v856, %v1170
        %v1187 = vadd.f32 %v857, %v1171
        %v1188 = vadd.f32 %v858, %v1172
        %v1189 = vadd.f32 %v859, %v1173
        %v1190 = vadd.f32 %v860, %v1174
        %v1191 = vadd.f32 %v861, %v1175
        %v1192 = vadd.f32 %v862, %v1176
        %v1193 = vmul.f32 %v1129, 0.31622776
        %v1194 = vmul.f32 %v1130, 0.31622776
        %v1195 = vmul.f32 %v1131, 0.31622776
        %v1196 = vmul.f32 %v1132, 0.31622776
        %v1197 = vmul.f32 %v1133, 0.31622776
        %v1198 = vmul.f32 %v1134, 0.31622776
        %v1199 = vmul.f32 %v1135, 0.31622776
        %v1200 = vmul.f32 %v1136, 0.31622776
        %v1201 = vmul.f32 %v1137, 0.31622776
        %v1202 = vmul.f32 %v1138, 0.31622776
        %v1203 = vmul.f32 %v1139, 0.31622776
        %v1204 = vmul.f32 %v1140, 0.31622776
        %v1205 = vmul.f32 %v1141, 0.31622776
        %v1206 = vmul.f32 %v1142, 0.31622776
        %v1207 = vmul.f32 %v1143, 0.31622776
        %v1208 = vmul.f32 %v1144, 0.31622776
        %v1209 = vadd.f32 %v1177, %v1193
        %v1210 = vadd.f32 %v1178, %v1194
        %v1211 = vadd.f32 %v1179, %v1195
        %v1212 = vadd.f32 %v1180, %v1196
        %v1213 = vadd.f32 %v1181, %v1197
        %v1214 = vadd.f32 %v1182, %v1198
        %v1215 = vadd.f32 %v1183, %v1199
        %v1216 = vadd.f32 %v1184, %v1200
        %v1217 = vadd.f32 %v1185, %v1201
        %v1218 = vadd.f32 %v1186, %v1202
        %v1219 = vadd.f32 %v1187, %v1203
        %v1220 = vadd.f32 %v1188, %v1204
        %v1221 = vadd.f32 %v1189, %v1205
        %v1222 = vadd.f32 %v1190, %v1206
        %v1223 = vadd.f32 %v1191, %v1207
        %v1224 = vadd.f32 %v1192, %v1208
        %s1225 = scalar_lea.vmem %s365, 128 [#allocation2]
        %v1226 = vld [vmem:[%s1225] sm:$0xff]
        %v1227 = vld [vmem:[%s1225 + $0x8] sm:$0xff]
        %v1228 = vld [vmem:[%s1225 + $0x10] sm:$0xff]
        %v1229 = vld [vmem:[%s1225 + $0x18] sm:$0xff]
        %v1230 = vld [vmem:[%s1225 + $0x20] sm:$0xff]
        %v1231 = vld [vmem:[%s1225 + $0x28] sm:$0xff]
        %v1232 = vld [vmem:[%s1225 + $0x30] sm:$0xff]
        %v1233 = vld [vmem:[%s1225 + $0x38] sm:$0xff]
        %v1234 = vld [vmem:[%s1225 + $0x40] sm:$0xff]
        %v1235 = vld [vmem:[%s1225 + $0x48] sm:$0xff]
        %v1236 = vld [vmem:[%s1225 + $0x50] sm:$0xff]
        %v1237 = vld [vmem:[%s1225 + $0x58] sm:$0xff]
        %v1238 = vld [vmem:[%s1225 + $0x60] sm:$0xff]
        %v1239 = vld [vmem:[%s1225 + $0x68] sm:$0xff]
        %v1240 = vld [vmem:[%s1225 + $0x70] sm:$0xff]
        %v1241 = vld [vmem:[%s1225 + $0x78] sm:$0xff]
        %v1242 = vpack.c.bf16 %v1210, %v1209
        %v1243 = vpack.c.bf16 %v1212, %v1211
        %v1244 = vpack.c.bf16 %v1214, %v1213
        %v1245 = vpack.c.bf16 %v1216, %v1215
        %v1246 = vpack.c.bf16 %v1218, %v1217
        %v1247 = vpack.c.bf16 %v1220, %v1219
        %v1248 = vpack.c.bf16 %v1222, %v1221
        %v1249 = vpack.c.bf16 %v1224, %v1223
        %s1250 = scalar_lea.vmem %s2, 16
        %v1251 = vld [vmem:[%s1250] sm:$0xf]
        %v1252 = vld [vmem:[%s1250 + $0x4] sm:$0xf]
        %v1253 = vld [vmem:[%s1250 + $0x8] sm:$0xf]
        %v1254 = vld [vmem:[%s1250 + $0xc] sm:$0xf]
        %v1255 = vlaneseq
        %v1256 = vshrl.u32 %v1255, 7
        %v1257 = vsub.s32 2, %v1256
        %v1258 = vrot.slane %v426, %v1257
        %v1263 = vunpack.c.l.b16 %v1251
        %v1264 = vunpack.c.l.b16 %v1252
        %v1265 = vunpack.c.l.b16 %v1253
        %v1266 = vunpack.c.l.b16 %v1254
        %v1267 = vpack.c.b16 %v1264, %v1263
        %v1268 = vpack.c.b16 %v1266, %v1265
        %v1272 = vsel %vm907, %v1242, 0
        %v1275 = vsel %vm907, %v1243, 0
        %v1278 = vsel %vm907, %v1244, 0
        %v1281 = vsel %vm907, %v1245, 0
        %v1284 = vsel %vm907, %v1246, 0
        %v1287 = vsel %vm907, %v1247, 0
        %v1290 = vsel %vm907, %v1248, 0
        %v1293 = vsel %vm907, %v1249, 0
        %1295 = vmatprep.subr.bf16.mxu0 0
        %1296 = vmatpush1.bf16.msra.mxu0 %v1267
        %1297 = vmatprep.subr.bf16.mxu0 0
        %1298 = vmatpush1.bf16.msra.mxu0 %v1268
        %1299 = vmatprep.subr.bf16.mxu0 0
        %1300 = vmatpush1.bf16.msra.mxu0 0
        %1301 = vmatprep.subr.bf16.mxu0 0
        %1302 = vmatpush1.bf16.msra.mxu0 0
        %1303 = vmatprep.subr.bf16.mxu0 0
        %1304 = vmatpush1.bf16.msra.mxu0 0
        %1305 = vmatprep.subr.bf16.mxu0 0
        %1306 = vmatpush1.bf16.msra.mxu0 0
        %1307 = vmatprep.subr.bf16.mxu0 0
        %1308 = vmatpush1.bf16.msra.mxu0 0
        %1309 = vmatprep.subr.bf16.mxu0 0
        %1310 = vmatpush1.bf16.msra.mxu0 0
        %1311 = vmatprep.subr.bf16.mxu0 0
        %1312 = vmatpush1.bf16.msra.mxu0 0
        %1313 = vmatprep.subr.bf16.mxu0 0
        %1314 = vmatpush1.bf16.msra.mxu0 0
        %1315 = vmatprep.subr.bf16.mxu0 0
        %1316 = vmatpush1.bf16.msra.mxu0 0
        %1317 = vmatprep.subr.bf16.mxu0 0
        %1318 = vmatpush1.bf16.msra.mxu0 0
        %1319 = vmatprep.subr.bf16.mxu0 0
        %1320 = vmatpush1.bf16.msra.mxu0 0
        %1321 = vmatprep.subr.bf16.mxu0 0
        %1322 = vmatpush1.bf16.msra.mxu0 0
        %1323 = vmatprep.subr.bf16.mxu0 0
        %1324 = vmatpush1.bf16.msra.mxu0 0
        %1325 = vmatprep.subr.bf16.mxu0 0
        %1326 = vmatpush1.bf16.msra.mxu0 0
        %1327 = vmatprep.mubr.bf16.mxu0 0
        %1328 = vmatmul.mubr.bf16.gmra.mrb[0].mxu0 %v1272
        %v1329 = vpop.f32.mrb[0].mxu0
        %v1330 = vadd.f32 %v1258, %v1329
        %v1331 = vpop.f32.mrb[0].mxu0
        %v1332 = vpop.f32.mrb[0].mxu0
        %v1333 = vadd.f32 %v1258, %v1332
        %v1334 = vpop.f32.mrb[0].mxu0
        %1335 = vmatprep.mubr.bf16.mxu0 0
        %1336 = vmatmul.mubr.bf16.gmra.mrb[0].mxu0 %v1275
        %v1337 = vpop.f32.mrb[0].mxu0
        %v1338 = vadd.f32 %v1258, %v1337
        %v1339 = vpop.f32.mrb[0].mxu0
        %v1340 = vpop.f32.mrb[0].mxu0
        %v1341 = vadd.f32 %v1258, %v1340
        %v1342 = vpop.f32.mrb[0].mxu0
        %1343 = vmatprep.mubr.bf16.mxu0 0
        %1344 = vmatmul.mubr.bf16.gmra.mrb[0].mxu0 %v1278
        %v1345 = vpop.f32.mrb[0].mxu0
        %v1346 = vadd.f32 %v1258, %v1345
        %v1347 = vpop.f32.mrb[0].mxu0
        %v1348 = vpop.f32.mrb[0].mxu0
        %v1349 = vadd.f32 %v1258, %v1348
        %v1350 = vpop.f32.mrb[0].mxu0
        %1351 = vmatprep.mubr.bf16.mxu0 0
        %1352 = vmatmul.mubr.bf16.gmra.mrb[0].mxu0 %v1281
        %v1353 = vpop.f32.mrb[0].mxu0
        %v1354 = vadd.f32 %v1258, %v1353
        %v1355 = vpop.f32.mrb[0].mxu0
        %v1356 = vpop.f32.mrb[0].mxu0
        %v1357 = vadd.f32 %v1258, %v1356
        %v1358 = vpop.f32.mrb[0].mxu0
        %1359 = vmatprep.mubr.bf16.mxu0 0
        %1360 = vmatmul.mubr.bf16.gmra.mrb[0].mxu0 %v1284
        %v1361 = vpop.f32.mrb[0].mxu0
        %v1362 = vadd.f32 %v1258, %v1361
        %v1363 = vpop.f32.mrb[0].mxu0
        %v1364 = vpop.f32.mrb[0].mxu0
        %v1365 = vadd.f32 %v1258, %v1364
        %v1366 = vpop.f32.mrb[0].mxu0
        %1367 = vmatprep.mubr.bf16.mxu0 0
        %1368 = vmatmul.mubr.bf16.gmra.mrb[0].mxu0 %v1287
        %v1369 = vpop.f32.mrb[0].mxu0
        %v1370 = vadd.f32 %v1258, %v1369
        %v1371 = vpop.f32.mrb[0].mxu0
        %v1372 = vpop.f32.mrb[0].mxu0
        %v1373 = vadd.f32 %v1258, %v1372
        %v1374 = vpop.f32.mrb[0].mxu0
        %1375 = vmatprep.mubr.bf16.mxu0 0
        %1376 = vmatmul.mubr.bf16.gmra.mrb[0].mxu0 %v1290
        %v1377 = vpop.f32.mrb[0].mxu0
        %v1378 = vadd.f32 %v1258, %v1377
        %v1379 = vpop.f32.mrb[0].mxu0
        %v1380 = vpop.f32.mrb[0].mxu0
        %v1381 = vadd.f32 %v1258, %v1380
        %v1382 = vpop.f32.mrb[0].mxu0
        %1383 = vmatprep.mubr.bf16.mxu0 0
        %1384 = vmatmul.mubr.bf16.gmra.mrb[0].mxu0 %v1293
        %v1385 = vpop.f32.mrb[0].mxu0
        %v1386 = vadd.f32 %v1258, %v1385
        %v1387 = vpop.f32.mrb[0].mxu0
        %v1388 = vpop.f32.mrb[0].mxu0
        %v1389 = vadd.f32 %v1258, %v1388
        %v1390 = vpop.f32.mrb[0].mxu0
        %1391 = vdwg.mxu0
        %v1392 = vlaneseq
        %v1393 = vshrl.u32 %v1392, 7
        %v1394 = vsub.s32 5, %v1393
        %v1395 = vrot.slane %v426, %v1394
        %v1396 = vmul.f32 %v1226, %v1395
        %v1397 = vmul.f32 %v1227, %v1395
        %v1398 = vmul.f32 %v1228, %v1395
        %v1399 = vmul.f32 %v1229, %v1395
        %v1400 = vmul.f32 %v1230, %v1395
        %v1401 = vmul.f32 %v1231, %v1395
        %v1402 = vmul.f32 %v1232, %v1395
        %v1403 = vmul.f32 %v1233, %v1395
        %v1404 = vmul.f32 %v1234, %v1395
        %v1405 = vmul.f32 %v1235, %v1395
        %v1406 = vmul.f32 %v1236, %v1395
        %v1407 = vmul.f32 %v1237, %v1395
        %v1408 = vmul.f32 %v1238, %v1395
        %v1409 = vmul.f32 %v1239, %v1395
        %v1410 = vmul.f32 %v1240, %v1395
        %v1411 = vmul.f32 %v1241, %v1395
        %v1412 = vsel %vm907, %v1396, 0.0
        %1413 = vadd.xlane.f32.xlu0 %v1412
        %v1414 = vpop.xlane.xlu0 %1413
        %v1415 = vsel %vm907, %v1397, 0.0
        %1416 = vadd.xlane.f32.xlu0 %v1415
        %v1417 = vpop.xlane.xlu0 %1416
        %v1418 = vsel %vm907, %v1398, 0.0
        %1419 = vadd.xlane.f32.xlu0 %v1418
        %v1420 = vpop.xlane.xlu0 %1419
        %v1421 = vsel %vm907, %v1399, 0.0
        %1422 = vadd.xlane.f32.xlu0 %v1421
        %v1423 = vpop.xlane.xlu0 %1422
        %v1424 = vsel %vm907, %v1400, 0.0
        %1425 = vadd.xlane.f32.xlu0 %v1424
        %v1426 = vpop.xlane.xlu0 %1425
        %v1427 = vsel %vm907, %v1401, 0.0
        %1428 = vadd.xlane.f32.xlu0 %v1427
        %v1429 = vpop.xlane.xlu0 %1428
        %v1430 = vsel %vm907, %v1402, 0.0
        %1431 = vadd.xlane.f32.xlu0 %v1430
        %v1432 = vpop.xlane.xlu0 %1431
        %v1433 = vsel %vm907, %v1403, 0.0
        %1434 = vadd.xlane.f32.xlu0 %v1433
        %v1435 = vpop.xlane.xlu0 %1434
        %v1436 = vsel %vm907, %v1404, 0.0
        %1437 = vadd.xlane.f32.xlu0 %v1436
        %v1438 = vpop.xlane.xlu0 %1437
        %v1439 = vsel %vm907, %v1405, 0.0
        %1440 = vadd.xlane.f32.xlu0 %v1439
        %v1441 = vpop.xlane.xlu0 %1440
        %v1442 = vsel %vm907, %v1406, 0.0
        %1443 = vadd.xlane.f32.xlu0 %v1442
        %v1444 = vpop.xlane.xlu0 %1443
        %v1445 = vsel %vm907, %v1407, 0.0
        %1446 = vadd.xlane.f32.xlu0 %v1445
        %v1447 = vpop.xlane.xlu0 %1446
        %v1448 = vsel %vm907, %v1408, 0.0
        %1449 = vadd.xlane.f32.xlu0 %v1448
        %v1450 = vpop.xlane.xlu0 %1449
        %v1451 = vsel %vm907, %v1409, 0.0
        %1452 = vadd.xlane.f32.xlu0 %v1451
        %v1453 = vpop.xlane.xlu0 %1452
        %v1454 = vsel %vm907, %v1410, 0.0
        %1455 = vadd.xlane.f32.xlu0 %v1454
        %v1456 = vpop.xlane.xlu0 %1455
        %v1457 = vsel %vm907, %v1411, 0.0
        %1458 = vadd.xlane.f32.xlu0 %v1457
        %v1459 = vpop.xlane.xlu0 %1458
        %v1460 = vmul.f32 %v1414, %v1395
        %v1461 = vmul.f32 %v1417, %v1395
        %v1462 = vmul.f32 %v1420, %v1395
        %v1463 = vmul.f32 %v1423, %v1395
        %v1464 = vmul.f32 %v1426, %v1395
        %v1465 = vmul.f32 %v1429, %v1395
        %v1466 = vmul.f32 %v1432, %v1395
        %v1467 = vmul.f32 %v1435, %v1395
        %v1468 = vmul.f32 %v1438, %v1395
        %v1469 = vmul.f32 %v1441, %v1395
        %v1470 = vmul.f32 %v1444, %v1395
        %v1471 = vmul.f32 %v1447, %v1395
        %v1472 = vmul.f32 %v1450, %v1395
        %v1473 = vmul.f32 %v1453, %v1395
        %v1474 = vmul.f32 %v1456, %v1395
        %v1475 = vmul.f32 %v1459, %v1395
        %v1476 = vmul.f32 %v1226, 0.0001
        %v1477 = vmul.f32 %v1227, 0.0001
        %v1478 = vmul.f32 %v1228, 0.0001
        %v1479 = vmul.f32 %v1229, 0.0001
        %v1480 = vmul.f32 %v1230, 0.0001
        %v1481 = vmul.f32 %v1231, 0.0001
        %v1482 = vmul.f32 %v1232, 0.0001
        %v1483 = vmul.f32 %v1233, 0.0001
        %v1484 = vmul.f32 %v1234, 0.0001
        %v1485 = vmul.f32 %v1235, 0.0001
        %v1486 = vmul.f32 %v1236, 0.0001
        %v1487 = vmul.f32 %v1237, 0.0001
        %v1488 = vmul.f32 %v1238, 0.0001
        %v1489 = vmul.f32 %v1239, 0.0001
        %v1490 = vmul.f32 %v1240, 0.0001
        %v1491 = vmul.f32 %v1241, 0.0001
        %v1492 = vadd.f32 %v1460, %v1476
        %v1493 = vadd.f32 %v1461, %v1477
        %v1494 = vadd.f32 %v1462, %v1478
        %v1495 = vadd.f32 %v1463, %v1479
        %v1496 = vadd.f32 %v1464, %v1480
        %v1497 = vadd.f32 %v1465, %v1481
        %v1498 = vadd.f32 %v1466, %v1482
        %v1499 = vadd.f32 %v1467, %v1483
        %v1500 = vadd.f32 %v1468, %v1484
        %v1501 = vadd.f32 %v1469, %v1485
        %v1502 = vadd.f32 %v1470, %v1486
        %v1503 = vadd.f32 %v1471, %v1487
        %v1504 = vadd.f32 %v1472, %v1488
        %v1505 = vadd.f32 %v1473, %v1489
        %v1506 = vadd.f32 %v1474, %v1490
        %v1507 = vadd.f32 %v1475, %v1491
        %v1508 = vtanh.pop %v1330
        %v1509 = vtanh.pop %v1333
        %v1510 = vtanh.pop %v1338
        %v1511 = vtanh.pop %v1341
        %v1512 = vtanh.pop %v1346
        %v1513 = vtanh.pop %v1349
        %v1514 = vtanh.pop %v1354
        %v1515 = vtanh.pop %v1357
        %v1516 = vtanh.pop %v1362
        %v1517 = vtanh.pop %v1365
        %v1518 = vtanh.pop %v1370
        %v1519 = vtanh.pop %v1373
        %v1520 = vtanh.pop %v1378
        %v1521 = vtanh.pop %v1381
        %v1522 = vtanh.pop %v1386
        %v1523 = vtanh.pop %v1389
        %v1524 = vmul.f32 %v1508, 0.1
        %v1525 = vmul.f32 %v1509, 0.1
        %v1526 = vmul.f32 %v1510, 0.1
        %v1527 = vmul.f32 %v1511, 0.1
        %v1528 = vmul.f32 %v1512, 0.1
        %v1529 = vmul.f32 %v1513, 0.1
        %v1530 = vmul.f32 %v1514, 0.1
        %v1531 = vmul.f32 %v1515, 0.1
        %v1532 = vmul.f32 %v1516, 0.1
        %v1533 = vmul.f32 %v1517, 0.1
        %v1534 = vmul.f32 %v1518, 0.1
        %v1535 = vmul.f32 %v1519, 0.1
        %v1536 = vmul.f32 %v1520, 0.1
        %v1537 = vmul.f32 %v1521, 0.1
        %v1538 = vmul.f32 %v1522, 0.1
        %v1539 = vmul.f32 %v1523, 0.1
        %v1540 = vadd.f32 %v1209, %v1524
        %v1541 = vadd.f32 %v1210, %v1525
        %v1542 = vadd.f32 %v1211, %v1526
        %v1543 = vadd.f32 %v1212, %v1527
        %v1544 = vadd.f32 %v1213, %v1528
        %v1545 = vadd.f32 %v1214, %v1529
        %v1546 = vadd.f32 %v1215, %v1530
        %v1547 = vadd.f32 %v1216, %v1531
        %v1548 = vadd.f32 %v1217, %v1532
        %v1549 = vadd.f32 %v1218, %v1533
        %v1550 = vadd.f32 %v1219, %v1534
        %v1551 = vadd.f32 %v1220, %v1535
        %v1552 = vadd.f32 %v1221, %v1536
        %v1553 = vadd.f32 %v1222, %v1537
        %v1554 = vadd.f32 %v1223, %v1538
        %v1555 = vadd.f32 %v1224, %v1539
        %v1556 = vmul.f32 %v1492, 0.31622776
        %v1557 = vmul.f32 %v1493, 0.31622776
        %v1558 = vmul.f32 %v1494, 0.31622776
        %v1559 = vmul.f32 %v1495, 0.31622776
        %v1560 = vmul.f32 %v1496, 0.31622776
        %v1561 = vmul.f32 %v1497, 0.31622776
        %v1562 = vmul.f32 %v1498, 0.31622776
        %v1563 = vmul.f32 %v1499, 0.31622776
        %v1564 = vmul.f32 %v1500, 0.31622776
        %v1565 = vmul.f32 %v1501, 0.31622776
        %v1566 = vmul.f32 %v1502, 0.31622776
        %v1567 = vmul.f32 %v1503, 0.31622776
        %v1568 = vmul.f32 %v1504, 0.31622776
        %v1569 = vmul.f32 %v1505, 0.31622776
        %v1570 = vmul.f32 %v1506, 0.31622776
        %v1571 = vmul.f32 %v1507, 0.31622776
        %v1572 = vadd.f32 %v1540, %v1556
        %v1573 = vadd.f32 %v1541, %v1557
        %v1574 = vadd.f32 %v1542, %v1558
        %v1575 = vadd.f32 %v1543, %v1559
        %v1576 = vadd.f32 %v1544, %v1560
        %v1577 = vadd.f32 %v1545, %v1561
        %v1578 = vadd.f32 %v1546, %v1562
        %v1579 = vadd.f32 %v1547, %v1563
        %v1580 = vadd.f32 %v1548, %v1564
        %v1581 = vadd.f32 %v1549, %v1565
        %v1582 = vadd.f32 %v1550, %v1566
        %v1583 = vadd.f32 %v1551, %v1567
        %v1584 = vadd.f32 %v1552, %v1568
        %v1585 = vadd.f32 %v1553, %v1569
        %v1586 = vadd.f32 %v1554, %v1570
        %v1587 = vadd.f32 %v1555, %v1571
        %v1588 = vlaneseq
        %v1589 = vshrl.u32 %v1588, 7
        %v1590 = vsub.s32 6, %v1589
        %v1591 = vrot.slane %v426, %v1590
        %v1592 = vmul.f32 %v1572, %v1591
        %v1593 = vmul.f32 %v1573, %v1591
        %v1594 = vmul.f32 %v1574, %v1591
        %v1595 = vmul.f32 %v1575, %v1591
        %v1596 = vmul.f32 %v1576, %v1591
        %v1597 = vmul.f32 %v1577, %v1591
        %v1598 = vmul.f32 %v1578, %v1591
        %v1599 = vmul.f32 %v1579, %v1591
        %v1600 = vmul.f32 %v1580, %v1591
        %v1601 = vmul.f32 %v1581, %v1591
        %v1602 = vmul.f32 %v1582, %v1591
        %v1603 = vmul.f32 %v1583, %v1591
        %v1604 = vmul.f32 %v1584, %v1591
        %v1605 = vmul.f32 %v1585, %v1591
        %v1606 = vmul.f32 %v1586, %v1591
        %v1607 = vmul.f32 %v1587, %v1591
        %v1608 = vsel %vm907, %v1592, 0.0
        %1609 = vadd.xlane.f32.xlu0 %v1608
        %v1610 = vpop.xlane.xlu0 %1609
        %v1611 = vsel %vm907, %v1593, 0.0
        %1612 = vadd.xlane.f32.xlu0 %v1611
        %v1613 = vpop.xlane.xlu0 %1612
        %v1614 = vsel %vm907, %v1594, 0.0
        %1615 = vadd.xlane.f32.xlu0 %v1614
        %v1616 = vpop.xlane.xlu0 %1615
        %v1617 = vsel %vm907, %v1595, 0.0
        %1618 = vadd.xlane.f32.xlu0 %v1617
        %v1619 = vpop.xlane.xlu0 %1618
        %v1620 = vsel %vm907, %v1596, 0.0
        %1621 = vadd.xlane.f32.xlu0 %v1620
        %v1622 = vpop.xlane.xlu0 %1621
        %v1623 = vsel %vm907, %v1597, 0.0
        %1624 = vadd.xlane.f32.xlu0 %v1623
        %v1625 = vpop.xlane.xlu0 %1624
        %v1626 = vsel %vm907, %v1598, 0.0
        %1627 = vadd.xlane.f32.xlu0 %v1626
        %v1628 = vpop.xlane.xlu0 %1627
        %v1629 = vsel %vm907, %v1599, 0.0
        %1630 = vadd.xlane.f32.xlu0 %v1629
        %v1631 = vpop.xlane.xlu0 %1630
        %v1632 = vsel %vm907, %v1600, 0.0
        %1633 = vadd.xlane.f32.xlu0 %v1632
        %v1634 = vpop.xlane.xlu0 %1633
        %v1635 = vsel %vm907, %v1601, 0.0
        %1636 = vadd.xlane.f32.xlu0 %v1635
        %v1637 = vpop.xlane.xlu0 %1636
        %v1638 = vsel %vm907, %v1602, 0.0
        %1639 = vadd.xlane.f32.xlu0 %v1638
        %v1640 = vpop.xlane.xlu0 %1639
        %v1641 = vsel %vm907, %v1603, 0.0
        %1642 = vadd.xlane.f32.xlu0 %v1641
        %v1643 = vpop.xlane.xlu0 %1642
        %v1644 = vsel %vm907, %v1604, 0.0
        %1645 = vadd.xlane.f32.xlu0 %v1644
        %v1646 = vpop.xlane.xlu0 %1645
        %v1647 = vsel %vm907, %v1605, 0.0
        %1648 = vadd.xlane.f32.xlu0 %v1647
        %v1649 = vpop.xlane.xlu0 %1648
        %v1650 = vsel %vm907, %v1606, 0.0
        %1651 = vadd.xlane.f32.xlu0 %v1650
        %v1652 = vpop.xlane.xlu0 %1651
        %v1653 = vsel %vm907, %v1607, 0.0
        %1654 = vadd.xlane.f32.xlu0 %v1653
        %v1655 = vpop.xlane.xlu0 %1654
        %v1656 = vlaneseq
        %v1657 = vshrl.u32 %v1656, 7
        %v1658 = vsub.s32 3, %v1657
        %v1659 = vrot.slane %v426, %v1658
        %v1660 = vadd.f32 %v1610, %v1659
        %v1661 = vadd.f32 %v1613, %v1659
        %v1662 = vadd.f32 %v1616, %v1659
        %v1663 = vadd.f32 %v1619, %v1659
        %v1664 = vadd.f32 %v1622, %v1659
        %v1665 = vadd.f32 %v1625, %v1659
        %v1666 = vadd.f32 %v1628, %v1659
        %v1667 = vadd.f32 %v1631, %v1659
        %v1668 = vadd.f32 %v1634, %v1659
        %v1669 = vadd.f32 %v1637, %v1659
        %v1670 = vadd.f32 %v1640, %v1659
        %v1671 = vadd.f32 %v1643, %v1659
        %v1672 = vadd.f32 %v1646, %v1659
        %v1673 = vadd.f32 %v1649, %v1659
        %v1674 = vadd.f32 %v1652, %v1659
        %v1675 = vadd.f32 %v1655, %v1659
        %1677 = vset.pattern.permute.xlu0 0
        %1678 = vperm.xlu0 %1677, %v1660
        %v1679 = vpop.permute.xlu0 %1678
        %1682 = vset.pattern.permute.xlu0 0
        %1683 = vperm.xlu0 %1682, %v1661
        %v1684 = vpop.permute.xlu0 %1683
        %1687 = vset.pattern.permute.xlu0 0
        %1688 = vperm.xlu0 %1687, %v1662
        %v1689 = vpop.permute.xlu0 %1688
        %1692 = vset.pattern.permute.xlu0 0
        %1693 = vperm.xlu0 %1692, %v1663
        %v1694 = vpop.permute.xlu0 %1693
        %1697 = vset.pattern.permute.xlu0 0
        %1698 = vperm.xlu0 %1697, %v1664
        %v1699 = vpop.permute.xlu0 %1698
        %1702 = vset.pattern.permute.xlu0 0
        %1703 = vperm.xlu0 %1702, %v1665
        %v1704 = vpop.permute.xlu0 %1703
        %1707 = vset.pattern.permute.xlu0 0
        %1708 = vperm.xlu0 %1707, %v1666
        %v1709 = vpop.permute.xlu0 %1708
        %1712 = vset.pattern.permute.xlu0 0
        %1713 = vperm.xlu0 %1712, %v1667
        %v1714 = vpop.permute.xlu0 %1713
        %1717 = vset.pattern.permute.xlu0 0
        %1718 = vperm.xlu0 %1717, %v1668
        %v1719 = vpop.permute.xlu0 %1718
        %1722 = vset.pattern.permute.xlu0 0
        %1723 = vperm.xlu0 %1722, %v1669
        %v1724 = vpop.permute.xlu0 %1723
        %1727 = vset.pattern.permute.xlu0 0
        %1728 = vperm.xlu0 %1727, %v1670
        %v1729 = vpop.permute.xlu0 %1728
        %1732 = vset.pattern.permute.xlu0 0
        %1733 = vperm.xlu0 %1732, %v1671
        %v1734 = vpop.permute.xlu0 %1733
        %1737 = vset.pattern.permute.xlu0 0
        %1738 = vperm.xlu0 %1737, %v1672
        %v1739 = vpop.permute.xlu0 %1738
        %1742 = vset.pattern.permute.xlu0 0
        %1743 = vperm.xlu0 %1742, %v1673
        %v1744 = vpop.permute.xlu0 %1743
        %1747 = vset.pattern.permute.xlu0 0
        %1748 = vperm.xlu0 %1747, %v1674
        %v1749 = vpop.permute.xlu0 %1748
        %1752 = vset.pattern.permute.xlu0 0
        %1753 = vperm.xlu0 %1752, %v1675
        %v1754 = vpop.permute.xlu0 %1753
        %1756 = vst [vmem:[%s406] sm:$0xff] %v1679
        %1757 = vst [vmem:[%s406 + $0x8] sm:$0xff] %v1684
        %1758 = vst [vmem:[%s406 + $0x10] sm:$0xff] %v1689
        %1759 = vst [vmem:[%s406 + $0x18] sm:$0xff] %v1694
        %1760 = vst [vmem:[%s406 + $0x20] sm:$0xff] %v1699
        %1761 = vst [vmem:[%s406 + $0x28] sm:$0xff] %v1704
        %1762 = vst [vmem:[%s406 + $0x30] sm:$0xff] %v1709
        %1763 = vst [vmem:[%s406 + $0x38] sm:$0xff] %v1714
        %1764 = vst [vmem:[%s406 + $0x40] sm:$0xff] %v1719
        %1765 = vst [vmem:[%s406 + $0x48] sm:$0xff] %v1724
        %1766 = vst [vmem:[%s406 + $0x50] sm:$0xff] %v1729
        %1767 = vst [vmem:[%s406 + $0x58] sm:$0xff] %v1734
        %1768 = vst [vmem:[%s406 + $0x60] sm:$0xff] %v1739
        %1769 = vst [vmem:[%s406 + $0x68] sm:$0xff] %v1744
        %1770 = vst [vmem:[%s406 + $0x70] sm:$0xff] %v1749
        %1771 = vst [vmem:[%s406 + $0x78] sm:$0xff] %v1754
        %s1772 = smul.u32 16, %s16
        %p1773 = scmp.lt.s32.totalorder %s1772, 63
        %s1774 = scalar_select %p1773, %s1772, 63
        %s1775 = smul.addr %s1774, 8
        %s1776 = scalar_lea.vmem %s5, %s1775
        // Predicated region
        $region79: #{sdenet_forward.1} parent=73 // pred_check
          %p1777 = pneg %p149
        $region80: #{sdenet_forward.1} parent=73 // pred_check_branch
          %1779 = sbr.rel (%p1777) target = $region82
        $region81: #{sdenet_forward.1} parent=73 // pred_region
          %s1780 = smul.u32 16, %s16
        $region82: #{sdenet_forward.1} parent=73 // pred_fallthru
          _
      $region74: #{sdenet_forward.1} parent=5 // pred_fallthru
        _
      %p1781 = scmp.le.s32.totalorder 2, %s11
      // Predicated region
      $region83: #{sdenet_forward.1} parent=5 // pred_check
        %p1782 = pneg %p1781
      $region84: #{sdenet_forward.1} parent=5 // pred_check_branch
        %1784 = sbr.rel (%p1782) target = $region86
      $region85: #{sdenet_forward.1} parent=5 // pred_region
        %s1785 = ssub.s32 %s11, 2
        // Predicated region
        $region87: #{sdenet_forward.1} parent=85 // pred_check
          %p1786 = pneg %p155
        $region88: #{sdenet_forward.1} parent=85 // pred_check_branch
          %1788 = sbr.rel (%p1786) target = $region90
        $region89: #{sdenet_forward.1} parent=85 // pred_region
          %s1789 = smul.u32 16, %s17
          %p1790 = scmp.lt.s32.totalorder %s1789, 63
          %s1791 = scalar_select %p1790, %s1789, 63
          %s1792 = smul.addr %s1791, 8
          %s1793 = scalar_lea.vmem %s5, %s1792
        $region90: #{sdenet_forward.1} parent=85 // pred_fallthru
          _
      $region86: #{sdenet_forward.1} parent=5 // pred_fallthru
        _
    $region6: #{sdenet_forward.1} parent=1 // loop_footer
      %s15 = sadd.s32 1, %s11
    $region7: #{sdenet_forward.1} parent=1 // loop_footer_branch
      %10 = sbr.rel target = $region3
    $region8: #{sdenet_forward.1} parent=1 // loop_exit
      _

</llo_original>
